<compile_context>
chip_gen: v7x
topology: tpu7x:2x2x1
jax: 0.10.0
libtpu: 0.0.40
codegen_flags: <defaults>
</compile_context>

<pallas_src>
import functools

import jax
import jax.numpy as jnp
from jax.experimental import pallas as pl
from jax.experimental.pallas import tpu as pltpu


def _round_up(x, m):
    return ((x + m - 1) // m) * m


def _pad2(a, rows, cols):
    return jnp.pad(a, ((0, rows - a.shape[0]), (0, cols - a.shape[1])))


def _pick_batch_tile(batch):
    # Multiples of 8 (sublane) when possible, capped at 128 to keep per-tile VMEM
    # modest on v7x (64 MiB physical VMEM). Tiny batches: one tile = full batch dim.
    for t in (128, 64, 32, 16, 8):
        if batch % t == 0:
            return t
    return batch


def _vae_fwd_kernel(x_ref, eps_ref,
                    we1_ref, be1_ref, we2_ref, be2_ref,
                    wmu_ref, bmu_ref, wlv_ref, blv_ref,
                    wd1_ref, bd1_ref, wd2_ref, bd2_ref,
                    dec_ref, sse_ref, kl_ref, *, compute_dtype):
    cd = compute_dtype

    def linear(x, w_ref, b_ref):
        # MXU matmul (optionally bf16 operands on v6e/v7x) with f32 accumulation,
        # bias add on the VPU.
        acc = jnp.dot(x.astype(cd), w_ref[...].astype(cd),
                      preferred_element_type=jnp.float32)
        return acc + b_ref[...]

    x = x_ref[...]                                      # (Bt, Dp) f32, zero-padded lanes

    # ---- encoder: flatten(img) -> inter -> zdim -------------------------------
    h = jnp.maximum(linear(x, we1_ref, be1_ref), 0.0)
    enc = linear(h, we2_ref, be2_ref)

    # ---- lin1 (zdim -> 2*zdim) split into mu / logvar heads (== .chunk(2, -1)) -
    mus = linear(enc, wmu_ref, bmu_ref)
    logvar = linear(enc, wlv_ref, blv_ref)

    # ---- reparameterization: z = mu + eps * exp(0.5 * logvar) ------------------
    std = jnp.exp(0.5 * logvar)
    z = mus + eps_ref[...] * std                        # eps (1, Zp) broadcasts over batch

    # ---- decoder: zdim -> inter -> flatten(img) --------------------------------
    hd = jnp.maximum(linear(z, wd1_ref, bd1_ref), 0.0)
    dec = linear(hd, wd2_ref, bd2_ref)
    dec_ref[...] = dec.astype(dec_ref.dtype)

    # ---- per-tile partial losses (lane-dense (1,1,128) slabs, summed in wrapper)
    diff = dec - x
    sse = jnp.sum(diff * diff)                          # sum of squared error, this tile
    kl = 0.5 * jnp.sum(jnp.exp(logvar) - 1.0 + mus * mus - logvar)
    sse_ref[...] = jnp.full(sse_ref.shape, sse, dtype=jnp.float32)
    kl_ref[...] = jnp.full(kl_ref.shape, kl, dtype=jnp.float32)


def _vae_forward_pallas(x_p, eps_p, params, *, b_tile, compute_dtype):
    (we1, be1, we2, be2, wmu, bmu, wlv, blv, wd1, bd1, wd2, bd2) = params
    batch, dp = x_p.shape
    ip = we1.shape[1]
    zp = wmu.shape[0]
    num_tiles = batch // b_tile

    def whole(shape):
        n = len(shape)
        return pl.BlockSpec(shape, lambda i: (0,) * n)

    in_specs = [
        pl.BlockSpec((b_tile, dp), lambda i: (i, 0)),    # flattened, padded image tile
        whole((1, zp)),                                  # eps (shared across batch)
        whole((dp, ip)), whole((1, ip)),                 # encoder layer 1
        whole((ip, zp)), whole((1, zp)),                 # encoder layer 2
        whole((zp, zp)), whole((1, zp)),                 # mu head
        whole((zp, zp)), whole((1, zp)),                 # logvar head
        whole((zp, ip)), whole((1, ip)),                 # decoder layer 1
        whole((ip, dp)), whole((1, dp)),                 # decoder layer 2
    ]
    out_specs = [
        pl.BlockSpec((b_tile, dp), lambda i: (i, 0)),    # decoded (lane-dense)
        pl.BlockSpec((1, 1, 128), lambda i: (i, 0, 0)),  # partial recon SSE per tile
        pl.BlockSpec((1, 1, 128), lambda i: (i, 0, 0)),  # partial KL per tile
    ]
    out_shape = [
        jax.ShapeDtypeStruct((batch, dp), jnp.float32),
        jax.ShapeDtypeStruct((num_tiles, 1, 128), jnp.float32),
        jax.ShapeDtypeStruct((num_tiles, 1, 128), jnp.float32),
    ]

    kernel = functools.partial(_vae_fwd_kernel, compute_dtype=compute_dtype)
    return pl.pallas_call(
        kernel,
        grid=(num_tiles,),
        in_specs=in_specs,
        out_specs=out_specs,
        out_shape=out_shape,
        compiler_params=pltpu.CompilerParams(
            dimension_semantics=("parallel",)),          # batch tiles shard across TCs (v7x)
    )(x_p, eps_p, we1, be1, we2, be2, wmu, bmu, wlv, blv, wd1, bd1, wd2, bd2)


class VAEPallas:
    """Pallas mirror of the PyTorch VAE forward pass with MLP encoder/decoder."""

    def __init__(self, zdim, inter_ch, img_size, key, in_ch=3):
        self.zdim = zdim
        self.inter_ch = inter_ch
        self.img_size = img_size
        self.in_ch = in_ch
        self.scale = 1.0

        d_img = in_ch * img_size * img_size
        self.d_img = d_img
        # Lane-dense (multiple-of-128) padded sizes.
        self.dp = _round_up(d_img, 128)
        self.zp = _round_up(zdim, 128)
        self.ip = _round_up(inter_ch, 128)

        def init_linear(k, fan_in, fan_out):
            # nn.Linear default init: U(-1/sqrt(fan_in), 1/sqrt(fan_in)); weight stored
            # transposed (in, out); bias pre-shaped to (1, out) once here.
            kw, kb = jax.random.split(k)
            bound = 1.0 / (fan_in ** 0.5)
            w = jax.random.uniform(kw, (fan_in, fan_out), jnp.float32, -bound, bound)
            b = jax.random.uniform(kb, (1, fan_out), jnp.float32, -bound, bound)
            return w, b

        ks = jax.random.split(key, 6)
        we1, be1 = init_linear(ks[0], d_img, inter_ch)     # encoder L1
        we2, be2 = init_linear(ks[1], inter_ch, zdim)      # encoder L2
        wmu, bmu = init_linear(ks[2], zdim, zdim)          # lin1 (mu half)
        wlv, blv = init_linear(ks[3], zdim, zdim)          # lin1 (logvar half)
        wd1, bd1 = init_linear(ks[4], zdim, inter_ch)      # decoder L1
        wd2, bd2 = init_linear(ks[5], inter_ch, d_img)     # decoder L2

        # Unpadded copies for the pure-JAX reference.
        self.ref_params = dict(we1=we1, be1=be1, we2=we2, be2=be2, wmu=wmu, bmu=bmu,
                               wlv=wlv, blv=blv, wd1=wd1, bd1=bd1, wd2=wd2, bd2=bd2)

        # Zero-pad every weight/bias ONCE at init to lane-dense shapes (exact math).
        self.params = (
            _pad2(we1, self.dp, self.ip), _pad2(be1, 1, self.ip),
            _pad2(we2, self.ip, self.zp), _pad2(be2, 1, self.zp),
            _pad2(wmu, self.zp, self.zp), _pad2(bmu, 1, self.zp),
            _pad2(wlv, self.zp, self.zp), _pad2(blv, 1, self.zp),
            _pad2(wd1, self.zp, self.ip), _pad2(bd1, 1, self.ip),
            _pad2(wd2, self.ip, self.dp), _pad2(bd2, 1, self.dp),
        )

    def __call__(self, img, eps, compute_dtype=jnp.float32):
        B, C, H, W = img.shape
        d_img = C * H * W
        x = img.reshape(B, d_img).astype(jnp.float32)
        x_p = jnp.pad(x, ((0, 0), (0, self.dp - d_img)))
        eps_p = jnp.pad(eps.reshape(1, self.zdim).astype(jnp.float32),
                        ((0, 0), (0, self.zp - self.zdim)))

        dec_p, sse_parts, kl_parts = _vae_forward_pallas(
            x_p, eps_p, self.params,
            b_tile=_pick_batch_tile(B), compute_dtype=compute_dtype)

        decoded = dec_p[:, :d_img].reshape(B, C, H, W)
        recon_loss = sse_parts[:, 0, 0].sum() / (B * d_img) / self.scale  # F.mse_loss (mean)
        kl_loss = kl_parts[:, 0, 0].sum()
        loss = (recon_loss + kl_loss) / B
        return decoded, loss


def vae_reference(img, eps_row, p, scale):
    # Pure-JAX reference mirroring the PyTorch forward (HIGHEST matmul precision).
    B = img.shape[0]
    x = img.reshape(B, -1)
    hi = jax.lax.Precision.HIGHEST
    dot = lambda a, b: jnp.dot(a, b, precision=hi)
    h = jnp.maximum(dot(x, p["we1"]) + p["be1"], 0.0)
    enc = dot(h, p["we2"]) + p["be2"]
    mus = dot(enc, p["wmu"]) + p["bmu"]
    logvar = dot(enc, p["wlv"]) + p["blv"]
    z = mus + eps_row * jnp.exp(0.5 * logvar)
    hd = jnp.maximum(dot(z, p["wd1"]) + p["bd1"], 0.0)
    dec = dot(hd, p["wd2"]) + p["bd2"]
    recon = jnp.mean((x - dec) ** 2) / scale
    kl = 0.5 * jnp.sum(jnp.exp(logvar) - 1.0 + mus ** 2 - logvar)
    loss = (recon + kl) / B
    return dec.reshape(img.shape), loss


if __name__ == "__main__":
    key = jax.random.PRNGKey(0)
    k_img, k_eps, k_model = jax.random.split(key, 3)

    B, C, H, W = 2, 3, 16, 16           # small shapes consistent with the module
    zdim, inter_ch = 8, 32

    img = jax.random.uniform(k_img, (B, C, H, W), jnp.float32)     # ~ torch.rand
    eps = jax.random.normal(k_eps, (zdim,), jnp.float32)           # ~ torch.normal(0, 1), shared over batch

    model = VAEPallas(zdim, inter_ch, img_size=H, key=k_model, in_ch=C)

    # f32 path (portable; recommended on v5e).
    decoded, loss = model(img, eps)
    decoded = jax.block_until_ready(decoded)
    loss = jax.block_until_ready(loss)

    dec_ref, loss_ref = vae_reference(img, eps.reshape(1, -1), model.ref_params, model.scale)
    assert decoded.shape == img.shape
    assert jnp.allclose(decoded, dec_ref, atol=2e-3, rtol=2e-3)
    assert jnp.allclose(loss, loss_ref, atol=2e-3, rtol=2e-3)

    # bf16-operand MXU path (recommended on v6e/v7x) — looser tolerance for bf16 rounding.
    dec_bf, loss_bf = model(img, eps, compute_dtype=jnp.bfloat16)
    dec_bf = jax.block_until_ready(dec_bf)
    assert jnp.allclose(dec_bf, dec_ref, atol=7e-2, rtol=7e-2)
    assert abs(float(loss_bf) - float(loss_ref)) <= 0.1 * abs(float(loss_ref)) + 0.1

    print("KERNEL_OK")
</pallas_src>

<mosaic_0001>
module attributes {stable_mosaic.version = 11 : i64} {
  func.func @_vae_fwd_kernel(%arg0: i32, %arg1: memref<2x768xf32, #tpu.memory_space<vmem>>, %arg2: memref<1x128xf32, #tpu.memory_space<vmem>>, %arg3: memref<768x128xf32, #tpu.memory_space<vmem>>, %arg4: memref<1x128xf32, #tpu.memory_space<vmem>>, %arg5: memref<128x128xf32, #tpu.memory_space<vmem>>, %arg6: memref<1x128xf32, #tpu.memory_space<vmem>>, %arg7: memref<128x128xf32, #tpu.memory_space<vmem>>, %arg8: memref<1x128xf32, #tpu.memory_space<vmem>>, %arg9: memref<128x128xf32, #tpu.memory_space<vmem>>, %arg10: memref<1x128xf32, #tpu.memory_space<vmem>>, %arg11: memref<128x128xf32, #tpu.memory_space<vmem>>, %arg12: memref<1x128xf32, #tpu.memory_space<vmem>>, %arg13: memref<128x768xf32, #tpu.memory_space<vmem>>, %arg14: memref<1x768xf32, #tpu.memory_space<vmem>>, %arg15: memref<2x768xf32, #tpu.memory_space<vmem>>, %arg16: memref<1x1x128xf32, #tpu.memory_space<vmem>>, %arg17: memref<1x1x128xf32, #tpu.memory_space<vmem>>) attributes {dimension_semantics = [#tpu.dimension_semantics<parallel>], iteration_bounds = array<i64: 1>, scalar_prefetch = 0 : i64, scratch_operands = 0 : i64, tpu.core_type = #tpu.core_type<tc>, window_params = [{transform_indices = @transform_0, window_bounds = array<i64: 2, 768>}, {pipeline_mode = #tpu.pipeline_mode<synchronous>, transform_indices = @transform_1, window_bounds = array<i64: 1, 128>}, {pipeline_mode = #tpu.pipeline_mode<synchronous>, transform_indices = @transform_2, window_bounds = array<i64: 768, 128>}, {pipeline_mode = #tpu.pipeline_mode<synchronous>, transform_indices = @transform_3, window_bounds = array<i64: 1, 128>}, {pipeline_mode = #tpu.pipeline_mode<synchronous>, transform_indices = @transform_4, window_bounds = array<i64: 128, 128>}, {pipeline_mode = #tpu.pipeline_mode<synchronous>, transform_indices = @transform_5, window_bounds = array<i64: 1, 128>}, {pipeline_mode = #tpu.pipeline_mode<synchronous>, transform_indices = @transform_6, window_bounds = array<i64: 128, 128>}, {pipeline_mode = #tpu.pipeline_mode<synchronous>, transform_indices = @transform_7, window_bounds = array<i64: 1, 128>}, {pipeline_mode = #tpu.pipeline_mode<synchronous>, transform_indices = @transform_8, window_bounds = array<i64: 128, 128>}, {pipeline_mode = #tpu.pipeline_mode<synchronous>, transform_indices = @transform_9, window_bounds = array<i64: 1, 128>}, {pipeline_mode = #tpu.pipeline_mode<synchronous>, transform_indices = @transform_10, window_bounds = array<i64: 128, 128>}, {pipeline_mode = #tpu.pipeline_mode<synchronous>, transform_indices = @transform_11, window_bounds = array<i64: 1, 128>}, {pipeline_mode = #tpu.pipeline_mode<synchronous>, transform_indices = @transform_12, window_bounds = array<i64: 128, 768>}, {pipeline_mode = #tpu.pipeline_mode<synchronous>, transform_indices = @transform_13, window_bounds = array<i64: 1, 768>}, {transform_indices = @transform_14, window_bounds = array<i64: 2, 768>}, {transform_indices = @transform_15, window_bounds = array<i64: 1, 1, 128>}, {transform_indices = @transform_16, window_bounds = array<i64: 1, 1, 128>}]} {
    %c0 = arith.constant 0 : index
    %c0_0 = arith.constant 0 : index
    %0 = vector.load %arg1[%c0, %c0_0] : memref<2x768xf32, #tpu.memory_space<vmem>>, vector<2x768xf32>
    %c0_1 = arith.constant 0 : index
    %c0_2 = arith.constant 0 : index
    %1 = vector.load %arg3[%c0_1, %c0_2] : memref<768x128xf32, #tpu.memory_space<vmem>>, vector<768x128xf32>
    %cst = arith.constant dense<0.000000e+00> : vector<2x128xf32>
    %2 = tpu.matmul %0, %1, %cst {dimension_numbers = #tpu.dot_dimension_numbers<[1], [0], [0], [1], [0, 0, 1, 1], [], []>} : vector<2x768xf32>, vector<768x128xf32>, vector<2x128xf32> -> vector<2x128xf32>
    %c0_3 = arith.constant 0 : index
    %c0_4 = arith.constant 0 : index
    %3 = vector.load %arg4[%c0_3, %c0_4] : memref<1x128xf32, #tpu.memory_space<vmem>>, vector<1x128xf32>
    %4 = vector.broadcast %3 : vector<1x128xf32> to vector<2x128xf32>
    %5 = arith.addf %2, %4 : vector<2x128xf32>
    %cst_5 = arith.constant 0.000000e+00 : f32
    %6 = vector.broadcast %cst_5 : f32 to vector<2x128xf32>
    %7 = arith.maximumf %5, %6 : vector<2x128xf32>
    %c0_6 = arith.constant 0 : index
    %c0_7 = arith.constant 0 : index
    %8 = vector.load %arg5[%c0_6, %c0_7] : memref<128x128xf32, #tpu.memory_space<vmem>>, vector<128x128xf32>
    %cst_8 = arith.constant dense<0.000000e+00> : vector<2x128xf32>
    %9 = tpu.matmul %7, %8, %cst_8 {dimension_numbers = #tpu.dot_dimension_numbers<[1], [0], [0], [1], [0, 0, 1, 1], [], []>} : vector<2x128xf32>, vector<128x128xf32>, vector<2x128xf32> -> vector<2x128xf32>
    %c0_9 = arith.constant 0 : index
    %c0_10 = arith.constant 0 : index
    %10 = vector.load %arg6[%c0_9, %c0_10] : memref<1x128xf32, #tpu.memory_space<vmem>>, vector<1x128xf32>
    %11 = vector.broadcast %10 : vector<1x128xf32> to vector<2x128xf32>
    %12 = arith.addf %9, %11 : vector<2x128xf32>
    %c0_11 = arith.constant 0 : index
    %c0_12 = arith.constant 0 : index
    %13 = vector.load %arg7[%c0_11, %c0_12] : memref<128x128xf32, #tpu.memory_space<vmem>>, vector<128x128xf32>
    %cst_13 = arith.constant dense<0.000000e+00> : vector<2x128xf32>
    %14 = tpu.matmul %12, %13, %cst_13 {dimension_numbers = #tpu.dot_dimension_numbers<[1], [0], [0], [1], [0, 0, 1, 1], [], []>} : vector<2x128xf32>, vector<128x128xf32>, vector<2x128xf32> -> vector<2x128xf32>
    %c0_14 = arith.constant 0 : index
    %c0_15 = arith.constant 0 : index
    %15 = vector.load %arg8[%c0_14, %c0_15] : memref<1x128xf32, #tpu.memory_space<vmem>>, vector<1x128xf32>
    %16 = vector.broadcast %15 : vector<1x128xf32> to vector<2x128xf32>
    %17 = arith.addf %14, %16 : vector<2x128xf32>
    %c0_16 = arith.constant 0 : index
    %c0_17 = arith.constant 0 : index
    %18 = vector.load %arg9[%c0_16, %c0_17] : memref<128x128xf32, #tpu.memory_space<vmem>>, vector<128x128xf32>
    %cst_18 = arith.constant dense<0.000000e+00> : vector<2x128xf32>
    %19 = tpu.matmul %12, %18, %cst_18 {dimension_numbers = #tpu.dot_dimension_numbers<[1], [0], [0], [1], [0, 0, 1, 1], [], []>} : vector<2x128xf32>, vector<128x128xf32>, vector<2x128xf32> -> vector<2x128xf32>
    %c0_19 = arith.constant 0 : index
    %c0_20 = arith.constant 0 : index
    %20 = vector.load %arg10[%c0_19, %c0_20] : memref<1x128xf32, #tpu.memory_space<vmem>>, vector<1x128xf32>
    %21 = vector.broadcast %20 : vector<1x128xf32> to vector<2x128xf32>
    %22 = arith.addf %19, %21 : vector<2x128xf32>
    %cst_21 = arith.constant 5.000000e-01 : f32
    %23 = vector.broadcast %cst_21 : f32 to vector<2x128xf32>
    %24 = arith.mulf %23, %22 : vector<2x128xf32>
    %25 = math.exp %24 : vector<2x128xf32>
    %c0_22 = arith.constant 0 : index
    %c0_23 = arith.constant 0 : index
    %26 = vector.load %arg2[%c0_22, %c0_23] : memref<1x128xf32, #tpu.memory_space<vmem>>, vector<1x128xf32>
    %27 = vector.broadcast %26 : vector<1x128xf32> to vector<2x128xf32>
    %28 = arith.mulf %27, %25 : vector<2x128xf32>
    %29 = arith.addf %17, %28 : vector<2x128xf32>
    %c0_24 = arith.constant 0 : index
    %c0_25 = arith.constant 0 : index
    %30 = vector.load %arg11[%c0_24, %c0_25] : memref<128x128xf32, #tpu.memory_space<vmem>>, vector<128x128xf32>
    %cst_26 = arith.constant dense<0.000000e+00> : vector<2x128xf32>
    %31 = tpu.matmul %29, %30, %cst_26 {dimension_numbers = #tpu.dot_dimension_numbers<[1], [0], [0], [1], [0, 0, 1, 1], [], []>} : vector<2x128xf32>, vector<128x128xf32>, vector<2x128xf32> -> vector<2x128xf32>
    %c0_27 = arith.constant 0 : index
    %c0_28 = arith.constant 0 : index
    %32 = vector.load %arg12[%c0_27, %c0_28] : memref<1x128xf32, #tpu.memory_space<vmem>>, vector<1x128xf32>
    %33 = vector.broadcast %32 : vector<1x128xf32> to vector<2x128xf32>
    %34 = arith.addf %31, %33 : vector<2x128xf32>
    %cst_29 = arith.constant 0.000000e+00 : f32
    %35 = vector.broadcast %cst_29 : f32 to vector<2x128xf32>
    %36 = arith.maximumf %34, %35 : vector<2x128xf32>
    %c0_30 = arith.constant 0 : index
    %c0_31 = arith.constant 0 : index
    %37 = vector.load %arg13[%c0_30, %c0_31] : memref<128x768xf32, #tpu.memory_space<vmem>>, vector<128x768xf32>
    %cst_32 = arith.constant dense<0.000000e+00> : vector<2x768xf32>
    %38 = tpu.matmul %36, %37, %cst_32 {dimension_numbers = #tpu.dot_dimension_numbers<[1], [0], [0], [1], [0, 0, 1, 1], [], []>} : vector<2x128xf32>, vector<128x768xf32>, vector<2x768xf32> -> vector<2x768xf32>
    %c0_33 = arith.constant 0 : index
    %c0_34 = arith.constant 0 : index
    %39 = vector.load %arg14[%c0_33, %c0_34] : memref<1x768xf32, #tpu.memory_space<vmem>>, vector<1x768xf32>
    %40 = vector.broadcast %39 : vector<1x768xf32> to vector<2x768xf32>
    %41 = arith.addf %38, %40 : vector<2x768xf32>
    %c0_35 = arith.constant 0 : index
    %c0_36 = arith.constant 0 : index
    %42 = vector.load %arg15[%c0_35, %c0_36] : memref<2x768xf32, #tpu.memory_space<vmem>>, vector<2x768xf32>
    tpu.vector_store %arg15[%c0_35, %c0_36], %41 {strides = array<i32>} : memref<2x768xf32, #tpu.memory_space<vmem>>, vector<2x768xf32>,
    %43 = arith.subf %41, %0 : vector<2x768xf32>
    %44 = arith.mulf %43, %43 : vector<2x768xf32>
    %45 = vector.shape_cast %44 : vector<2x768xf32> to vector<1x2x768xf32>
    %cst_37 = arith.constant dense<0.000000e+00> : vector<1xf32>
    %46 = vector.multi_reduction <add>, %45, %cst_37 [1, 2] : vector<1x2x768xf32> to vector<1xf32>
    %47 = vector.shape_cast %46 : vector<1xf32> to vector<1x1x1xf32>
    %48 = vector.extract %47[0, 0, 0] : f32 from vector<1x1x1xf32>
    %49 = math.exp %22 : vector<2x128xf32>
    %cst_38 = arith.constant 1.000000e+00 : f32
    %50 = vector.broadcast %cst_38 : f32 to vector<2x128xf32>
    %51 = arith.subf %49, %50 : vector<2x128xf32>
    %52 = arith.mulf %17, %17 : vector<2x128xf32>
    %53 = arith.addf %51, %52 : vector<2x128xf32>
    %54 = arith.subf %53, %22 : vector<2x128xf32>
    %55 = vector.shape_cast %54 : vector<2x128xf32> to vector<1x2x128xf32>
    %cst_39 = arith.constant dense<0.000000e+00> : vector<1xf32>
    %56 = vector.multi_reduction <add>, %55, %cst_39 [1, 2] : vector<1x2x128xf32> to vector<1xf32>
    %57 = vector.shape_cast %56 : vector<1xf32> to vector<1x1x1xf32>
    %58 = vector.extract %57[0, 0, 0] : f32 from vector<1x1x1xf32>
    %cst_40 = arith.constant 5.000000e-01 : f32
    %59 = arith.mulf %cst_40, %58 : f32
    %60 = vector.broadcast %48 : f32 to vector<1x1x128xf32>
    %c0_41 = arith.constant 0 : index
    %c0_42 = arith.constant 0 : index
    %c0_43 = arith.constant 0 : index
    %61 = vector.load %arg16[%c0_41, %c0_42, %c0_43] : memref<1x1x128xf32, #tpu.memory_space<vmem>>, vector<1x1x128xf32>
    tpu.vector_store %arg16[%c0_41, %c0_42, %c0_43], %60 {strides = array<i32>} : memref<1x1x128xf32, #tpu.memory_space<vmem>>, vector<1x1x128xf32>,
    %62 = vector.broadcast %59 : f32 to vector<1x1x128xf32>
    %c0_44 = arith.constant 0 : index
    %c0_45 = arith.constant 0 : index
    %c0_46 = arith.constant 0 : index
    %63 = vector.load %arg17[%c0_44, %c0_45, %c0_46] : memref<1x1x128xf32, #tpu.memory_space<vmem>>, vector<1x1x128xf32>
    tpu.vector_store %arg17[%c0_44, %c0_45, %c0_46], %62 {strides = array<i32>} : memref<1x1x128xf32, #tpu.memory_space<vmem>>, vector<1x1x128xf32>,
    return
  }
  func.func @transform_0(%arg0: i32) -> (i32, i32) {
    %c0_i32 = arith.constant 0 : i32
    %c0_i32_0 = arith.constant 0 : i32
    return %arg0, %c0_i32 : i32, i32
  }
  func.func @transform_1(%arg0: i32) -> (i32, i32) {
    %c0_i32 = arith.constant 0 : i32
    %c0_i32_0 = arith.constant 0 : i32
    %c0_i32_1 = arith.constant 0 : i32
    return %c0_i32, %c0_i32_0 : i32, i32
  }
  func.func @transform_2(%arg0: i32) -> (i32, i32) {
    %c0_i32 = arith.constant 0 : i32
    %c0_i32_0 = arith.constant 0 : i32
    %c0_i32_1 = arith.constant 0 : i32
    return %c0_i32, %c0_i32_0 : i32, i32
  }
  func.func @transform_3(%arg0: i32) -> (i32, i32) {
    %c0_i32 = arith.constant 0 : i32
    %c0_i32_0 = arith.constant 0 : i32
    %c0_i32_1 = arith.constant 0 : i32
    return %c0_i32, %c0_i32_0 : i32, i32
  }
  func.func @transform_4(%arg0: i32) -> (i32, i32) {
    %c0_i32 = arith.constant 0 : i32
    %c0_i32_0 = arith.constant 0 : i32
    %c0_i32_1 = arith.constant 0 : i32
    return %c0_i32, %c0_i32_0 : i32, i32
  }
  func.func @transform_5(%arg0: i32) -> (i32, i32) {
    %c0_i32 = arith.constant 0 : i32
    %c0_i32_0 = arith.constant 0 : i32
    %c0_i32_1 = arith.constant 0 : i32
    return %c0_i32, %c0_i32_0 : i32, i32
  }
  func.func @transform_6(%arg0: i32) -> (i32, i32) {
    %c0_i32 = arith.constant 0 : i32
    %c0_i32_0 = arith.constant 0 : i32
    %c0_i32_1 = arith.constant 0 : i32
    return %c0_i32, %c0_i32_0 : i32, i32
  }
  func.func @transform_7(%arg0: i32) -> (i32, i32) {
    %c0_i32 = arith.constant 0 : i32
    %c0_i32_0 = arith.constant 0 : i32
    %c0_i32_1 = arith.constant 0 : i32
    return %c0_i32, %c0_i32_0 : i32, i32
  }
  func.func @transform_8(%arg0: i32) -> (i32, i32) {
    %c0_i32 = arith.constant 0 : i32
    %c0_i32_0 = arith.constant 0 : i32
    %c0_i32_1 = arith.constant 0 : i32
    return %c0_i32, %c0_i32_0 : i32, i32
  }
  func.func @transform_9(%arg0: i32) -> (i32, i32) {
    %c0_i32 = arith.constant 0 : i32
    %c0_i32_0 = arith.constant 0 : i32
    %c0_i32_1 = arith.constant 0 : i32
    return %c0_i32, %c0_i32_0 : i32, i32
  }
  func.func @transform_10(%arg0: i32) -> (i32, i32) {
    %c0_i32 = arith.constant 0 : i32
    %c0_i32_0 = arith.constant 0 : i32
    %c0_i32_1 = arith.constant 0 : i32
    return %c0_i32, %c0_i32_0 : i32, i32
  }
  func.func @transform_11(%arg0: i32) -> (i32, i32) {
    %c0_i32 = arith.constant 0 : i32
    %c0_i32_0 = arith.constant 0 : i32
    %c0_i32_1 = arith.constant 0 : i32
    return %c0_i32, %c0_i32_0 : i32, i32
  }
  func.func @transform_12(%arg0: i32) -> (i32, i32) {
    %c0_i32 = arith.constant 0 : i32
    %c0_i32_0 = arith.constant 0 : i32
    %c0_i32_1 = arith.constant 0 : i32
    return %c0_i32, %c0_i32_0 : i32, i32
  }
  func.func @transform_13(%arg0: i32) -> (i32, i32) {
    %c0_i32 = arith.constant 0 : i32
    %c0_i32_0 = arith.constant 0 : i32
    %c0_i32_1 = arith.constant 0 : i32
    return %c0_i32, %c0_i32_0 : i32, i32
  }
  func.func @transform_14(%arg0: i32) -> (i32, i32) {
    %c0_i32 = arith.constant 0 : i32
    %c0_i32_0 = arith.constant 0 : i32
    return %arg0, %c0_i32 : i32, i32
  }
  func.func @transform_15(%arg0: i32) -> (i32, i32, i32) {
    %c0_i32 = arith.constant 0 : i32
    %c0_i32_0 = arith.constant 0 : i32
    %c0_i32_1 = arith.constant 0 : i32
    return %arg0, %c0_i32, %c0_i32_0 : i32, i32, i32
  }
  func.func @transform_16(%arg0: i32) -> (i32, i32, i32) {
    %c0_i32 = arith.constant 0 : i32
    %c0_i32_0 = arith.constant 0 : i32
    %c0_i32_1 = arith.constant 0 : i32
    return %arg0, %c0_i32, %c0_i32_0 : i32, i32, i32
  }
}

</mosaic_0001>

<llo_original>
// kernel: tpu_custom_call.1
$region0: #{tpu_custom_call.1}
  #allocation0 [shape = 'u32[]', space=smem, size = 0x4, offset = 0x4, fixed_abs, tag = 'smem constant byte address 0x4 - core index']
  #allocation1 [shape = 'u32[144,128]{1,0:T(1,128)}', space=vmem, size = 0x12000, scoped, tag = 'internal scratch']
  %s0 = inlined_call_operand.hbm [shape: f32[2,768], index: 0, kind: input, shape index: {}]
  %s1 = inlined_call_operand.vmem [shape: f32[1,128], index: 1, kind: input, shape index: {}]
  %s2 = inlined_call_operand.hbm [shape: f32[768,128], index: 2, kind: input, shape index: {}]
  %s3 = inlined_call_operand.vmem [shape: f32[1,128], index: 3, kind: input, shape index: {}]
  %s4 = inlined_call_operand.hbm [shape: f32[128,128], index: 4, kind: input, shape index: {}]
  %s5 = inlined_call_operand.vmem [shape: f32[1,128], index: 5, kind: input, shape index: {}]
  %s6 = inlined_call_operand.hbm [shape: f32[128,128], index: 6, kind: input, shape index: {}]
  %s7 = inlined_call_operand.vmem [shape: f32[1,128], index: 7, kind: input, shape index: {}]
  %s8 = inlined_call_operand.hbm [shape: f32[128,128], index: 8, kind: input, shape index: {}]
  %s9 = inlined_call_operand.vmem [shape: f32[1,128], index: 9, kind: input, shape index: {}]
  %s10 = inlined_call_operand.hbm [shape: f32[128,128], index: 10, kind: input, shape index: {}]
  %s11 = inlined_call_operand.vmem [shape: f32[1,128], index: 11, kind: input, shape index: {}]
  %s12 = inlined_call_operand.hbm [shape: f32[128,768], index: 12, kind: input, shape index: {}]
  %s13 = inlined_call_operand.vmem [shape: f32[1,768], index: 13, kind: input, shape index: {}]
  %s14 = inlined_call_operand.hbm [shape: f32[2,768], index: 14, kind: output, shape index: {0}]
  %s15 = inlined_call_operand.hbm [shape: f32[1,1,128], index: 15, kind: output, shape index: {1}]
  %s16 = inlined_call_operand.hbm [shape: f32[1,1,128], index: 16, kind: output, shape index: {2}]
  %17 = xla_tuple %s14, %s15, %s16
  %s18 = sld [smem:[#allocation0]]
  $region110: #{tpu_custom_call.1} parent=0
    _
  %s20 = ssub.s32 1, %s18
  %s21 = scalar_select 0, %s20, %s18
  $region1: #{tpu_custom_call.1} parent=0
    #allocation2 [shape = 'u8[6144]{0}', space=vmem, size = 0x1800, scoped, tag = 'input window, operand 0, single buffered']
    #allocation3 [shape = 's32[1]{0}', space=sflag, size = 0x4, scoped, tag = 'scoped memory for tpu_custom_call.1']
    #allocation4 [shape = 's32[1]{0}', space=sflag, size = 0x4, scoped, tag = 'scoped memory for tpu_custom_call.1']
    #allocation5 [shape = 'u8[393216]{0}', space=vmem, size = 0x60000, scoped, tag = 'input window, operand 2, single buffered']
    #allocation6 [shape = 's32[1]{0}', space=sflag, size = 0x4, scoped, tag = 'scoped memory for tpu_custom_call.1']
    #allocation7 [shape = 'u8[65536]{0}', space=vmem, size = 0x10000, scoped, tag = 'input window, operand 4, single buffered']
    #allocation8 [shape = 'u8[65536]{0}', space=vmem, size = 0x10000, scoped, tag = 'input window, operand 6, single buffered']
    #allocation9 [shape = 's32[1]{0}', space=sflag, size = 0x4, scoped, tag = 'scoped memory for tpu_custom_call.1']
    #allocation10 [shape = 'u8[65536]{0}', space=vmem, size = 0x10000, scoped, tag = 'input window, operand 8, single buffered']
    #allocation11 [shape = 'u8[65536]{0}', space=vmem, size = 0x10000, scoped, tag = 'input window, operand 10, single buffered']
    #allocation12 [shape = 's32[1]{0}', space=sflag, size = 0x4, scoped, tag = 'scoped memory for tpu_custom_call.1']
    #allocation13 [shape = 'u8[393216]{0}', space=vmem, size = 0x60000, scoped, tag = 'input window, operand 12, single buffered']
    #allocation14 [shape = 'u8[6144]{0}', space=vmem, size = 0x1800, scoped, tag = 'output window, operand 0, single buffered']
    #allocation15 [shape = 'u8[512]{0}', space=vmem, size = 0x400, scoped, tag = 'output window, operand 1, single buffered']
    #allocation16 [shape = 's32[1]{0}', space=sflag, size = 0x4, scoped, tag = 'scoped memory for tpu_custom_call.1']
    #allocation17 [shape = 'u8[512]{0}', space=vmem, size = 0x400, scoped, tag = 'output window, operand 2, single buffered']
    %22 = vsyncpa [#allocation3], 0
    %23 = vsyncpa [#allocation6], 0
    %24 = vsyncpa [#allocation9], 0
    %25 = vsyncpa [#allocation12], 0
    %26 = vsyncpa [#allocation4], 0
    %27 = vsyncpa [#allocation16], 0
    // Predicated region
    $region2: #{tpu_custom_call.1} parent=1 // pred_check
      _
    $region3: #{tpu_custom_call.1} parent=1 // pred_check_branch
      %29 = sbr.rel (0) target = $region5
    $region4: #{tpu_custom_call.1} parent=1 // pred_region
      %s31 = ssub.s32 192, 192
      %32 = vsyncadd [#allocation3], %s31
      %s34 = sshll.u32 [#allocation2], 4
      %s35 = int_to_ptr.vmem [resolvable:$true] %s34
      %37 = dma.hbm_to_vmem [thread:$0]  %s0, 192, %s35, [#allocation3]
    $region5: #{tpu_custom_call.1} parent=1 // pred_fallthru
      _
    // Predicated region
    $region6: #{tpu_custom_call.1} parent=1 // pred_check
      _
    $region7: #{tpu_custom_call.1} parent=1 // pred_check_branch
      %39 = sbr.rel (0) target = $region9
    $region8: #{tpu_custom_call.1} parent=1 // pred_region
      _
    $region9: #{tpu_custom_call.1} parent=1 // pred_fallthru
      _
    // Predicated region
    $region10: #{tpu_custom_call.1} parent=1 // pred_check
      _
    $region11: #{tpu_custom_call.1} parent=1 // pred_check_branch
      %41 = sbr.rel (0) target = $region13
    $region12: #{tpu_custom_call.1} parent=1 // pred_region
      %s43 = ssub.s32 12288, 12288
      %44 = vsyncadd [#allocation6], %s43
      %s45 = sshll.u32 [#allocation5], 4
      %s46 = int_to_ptr.vmem [resolvable:$true] %s45
      %51 = dma.hbm_to_vmem [thread:$0]  %s2, 12288, %s46, [#allocation6], 128, 128, 8
    $region13: #{tpu_custom_call.1} parent=1 // pred_fallthru
      _
    // Predicated region
    $region14: #{tpu_custom_call.1} parent=1 // pred_check
      _
    $region15: #{tpu_custom_call.1} parent=1 // pred_check_branch
      %53 = sbr.rel (0) target = $region17
    $region16: #{tpu_custom_call.1} parent=1 // pred_region
      _
    $region17: #{tpu_custom_call.1} parent=1 // pred_fallthru
      _
    // Predicated region
    $region18: #{tpu_custom_call.1} parent=1 // pred_check
      _
    $region19: #{tpu_custom_call.1} parent=1 // pred_check_branch
      %55 = sbr.rel (0) target = $region21
    $region20: #{tpu_custom_call.1} parent=1 // pred_region
      %s57 = ssub.s32 2048, 2048
      %58 = vsyncadd [#allocation6], %s57
      %s59 = sshll.u32 [#allocation7], 4
      %s60 = int_to_ptr.vmem [resolvable:$true] %s59
      %65 = dma.hbm_to_vmem [thread:$0]  %s4, 2048, %s60, [#allocation6], 128, 128, 8
    $region21: #{tpu_custom_call.1} parent=1 // pred_fallthru
      _
    // Predicated region
    $region22: #{tpu_custom_call.1} parent=1 // pred_check
      _
    $region23: #{tpu_custom_call.1} parent=1 // pred_check_branch
      %67 = sbr.rel (0) target = $region25
    $region24: #{tpu_custom_call.1} parent=1 // pred_region
      _
    $region25: #{tpu_custom_call.1} parent=1 // pred_fallthru
      _
    // Predicated region
    $region26: #{tpu_custom_call.1} parent=1 // pred_check
      _
    $region27: #{tpu_custom_call.1} parent=1 // pred_check_branch
      %69 = sbr.rel (0) target = $region29
    $region28: #{tpu_custom_call.1} parent=1 // pred_region
      %s71 = ssub.s32 2048, 2048
      %72 = vsyncadd [#allocation9], %s71
      %s73 = sshll.u32 [#allocation8], 4
      %s74 = int_to_ptr.vmem [resolvable:$true] %s73
      %79 = dma.hbm_to_vmem [thread:$0]  %s6, 2048, %s74, [#allocation9], 128, 128, 8
    $region29: #{tpu_custom_call.1} parent=1 // pred_fallthru
      _
    // Predicated region
    $region30: #{tpu_custom_call.1} parent=1 // pred_check
      _
    $region31: #{tpu_custom_call.1} parent=1 // pred_check_branch
      %81 = sbr.rel (0) target = $region33
    $region32: #{tpu_custom_call.1} parent=1 // pred_region
      _
    $region33: #{tpu_custom_call.1} parent=1 // pred_fallthru
      _
    // Predicated region
    $region34: #{tpu_custom_call.1} parent=1 // pred_check
      _
    $region35: #{tpu_custom_call.1} parent=1 // pred_check_branch
      %83 = sbr.rel (0) target = $region37
    $region36: #{tpu_custom_call.1} parent=1 // pred_region
      %s85 = ssub.s32 2048, 2048
      %86 = vsyncadd [#allocation9], %s85
      %s87 = sshll.u32 [#allocation10], 4
      %s88 = int_to_ptr.vmem [resolvable:$true] %s87
      %93 = dma.hbm_to_vmem [thread:$0]  %s8, 2048, %s88, [#allocation9], 128, 128, 8
    $region37: #{tpu_custom_call.1} parent=1 // pred_fallthru
      _
    // Predicated region
    $region38: #{tpu_custom_call.1} parent=1 // pred_check
      _
    $region39: #{tpu_custom_call.1} parent=1 // pred_check_branch
      %95 = sbr.rel (0) target = $region41
    $region40: #{tpu_custom_call.1} parent=1 // pred_region
      _
    $region41: #{tpu_custom_call.1} parent=1 // pred_fallthru
      _
    // Predicated region
    $region42: #{tpu_custom_call.1} parent=1 // pred_check
      _
    $region43: #{tpu_custom_call.1} parent=1 // pred_check_branch
      %97 = sbr.rel (0) target = $region45
    $region44: #{tpu_custom_call.1} parent=1 // pred_region
      %s99 = ssub.s32 2048, 2048
      %100 = vsyncadd [#allocation12], %s99
      %s101 = sshll.u32 [#allocation11], 4
      %s102 = int_to_ptr.vmem [resolvable:$true] %s101
      %107 = dma.hbm_to_vmem [thread:$0]  %s10, 2048, %s102, [#allocation12], 128, 128, 8
    $region45: #{tpu_custom_call.1} parent=1 // pred_fallthru
      _
    // Predicated region
    $region46: #{tpu_custom_call.1} parent=1 // pred_check
      _
    $region47: #{tpu_custom_call.1} parent=1 // pred_check_branch
      %109 = sbr.rel (0) target = $region49
    $region48: #{tpu_custom_call.1} parent=1 // pred_region
      _
    $region49: #{tpu_custom_call.1} parent=1 // pred_fallthru
      _
    // Predicated region
    $region50: #{tpu_custom_call.1} parent=1 // pred_check
      _
    $region51: #{tpu_custom_call.1} parent=1 // pred_check_branch
      %111 = sbr.rel (0) target = $region53
    $region52: #{tpu_custom_call.1} parent=1 // pred_region
      %s113 = ssub.s32 12288, 12288
      %114 = vsyncadd [#allocation12], %s113
      %s115 = sshll.u32 [#allocation13], 4
      %s116 = int_to_ptr.vmem [resolvable:$true] %s115
      %121 = dma.hbm_to_vmem [thread:$0]  %s12, 12288, %s116, [#allocation12], 768, 768, 48
    $region53: #{tpu_custom_call.1} parent=1 // pred_fallthru
      _
    // Predicated region
    $region54: #{tpu_custom_call.1} parent=1 // pred_check
      _
    $region55: #{tpu_custom_call.1} parent=1 // pred_check_branch
      %123 = sbr.rel (0) target = $region57
    $region56: #{tpu_custom_call.1} parent=1 // pred_region
      _
    $region57: #{tpu_custom_call.1} parent=1 // pred_fallthru
      _
    // Predicated region
    $region58: #{tpu_custom_call.1} parent=1 // pred_check
      _
    $region59: #{tpu_custom_call.1} parent=1 // pred_check_branch
      %125 = sbr.rel (0) target = $region61
    $region60: #{tpu_custom_call.1} parent=1 // pred_region
      %126 = dma.done [#allocation3], 192
    $region61: #{tpu_custom_call.1} parent=1 // pred_fallthru
      _
    // Predicated region
    $region62: #{tpu_custom_call.1} parent=1 // pred_check
      _
    $region63: #{tpu_custom_call.1} parent=1 // pred_check_branch
      %128 = sbr.rel (0) target = $region65
    $region64: #{tpu_custom_call.1} parent=1 // pred_region
      %129 = dma.done [#allocation6], 12288
    $region65: #{tpu_custom_call.1} parent=1 // pred_fallthru
      _
    // Predicated region
    $region66: #{tpu_custom_call.1} parent=1 // pred_check
      _
    $region67: #{tpu_custom_call.1} parent=1 // pred_check_branch
      %131 = sbr.rel (0) target = $region69
    $region68: #{tpu_custom_call.1} parent=1 // pred_region
      %132 = dma.done [#allocation6], 2048
    $region69: #{tpu_custom_call.1} parent=1 // pred_fallthru
      _
    // Predicated region
    $region70: #{tpu_custom_call.1} parent=1 // pred_check
      _
    $region71: #{tpu_custom_call.1} parent=1 // pred_check_branch
      %134 = sbr.rel (0) target = $region73
    $region72: #{tpu_custom_call.1} parent=1 // pred_region
      %135 = dma.done [#allocation9], 2048
    $region73: #{tpu_custom_call.1} parent=1 // pred_fallthru
      _
    // Predicated region
    $region74: #{tpu_custom_call.1} parent=1 // pred_check
      _
    $region75: #{tpu_custom_call.1} parent=1 // pred_check_branch
      %137 = sbr.rel (0) target = $region77
    $region76: #{tpu_custom_call.1} parent=1 // pred_region
      %138 = dma.done [#allocation9], 2048
    $region77: #{tpu_custom_call.1} parent=1 // pred_fallthru
      _
    // Predicated region
    $region78: #{tpu_custom_call.1} parent=1 // pred_check
      _
    $region79: #{tpu_custom_call.1} parent=1 // pred_check_branch
      %140 = sbr.rel (0) target = $region81
    $region80: #{tpu_custom_call.1} parent=1 // pred_region
      %141 = dma.done [#allocation12], 2048
    $region81: #{tpu_custom_call.1} parent=1 // pred_fallthru
      _
    // Predicated region
    $region82: #{tpu_custom_call.1} parent=1 // pred_check
      _
    $region83: #{tpu_custom_call.1} parent=1 // pred_check_branch
      %143 = sbr.rel (0) target = $region85
    $region84: #{tpu_custom_call.1} parent=1 // pred_region
      %144 = dma.done [#allocation12], 12288
    $region85: #{tpu_custom_call.1} parent=1 // pred_fallthru
      _
    %v145 = vld [vmem:[#allocation2] sm:$0xff]
    %v146 = vld [vmem:[#allocation2 + $0x8] sm:$0xf]
    %v147 = vld [vmem:[#allocation5] sm:$0xff]
    %v148 = vld [vmem:[#allocation5 + $0x8] sm:$0xff]
    %v149 = vld [vmem:[#allocation5 + $0x10] sm:$0xff]
    %v150 = vld [vmem:[#allocation5 + $0x18] sm:$0xff]
    %v151 = vld [vmem:[#allocation5 + $0x20] sm:$0xff]
    %v152 = vld [vmem:[#allocation5 + $0x28] sm:$0xff]
    %v153 = vld [vmem:[#allocation5 + $0x30] sm:$0xff]
    %v154 = vld [vmem:[#allocation5 + $0x38] sm:$0xff]
    %v155 = vld [vmem:[#allocation5 + $0x40] sm:$0xff]
    %v156 = vld [vmem:[#allocation5 + $0x48] sm:$0xff]
    %v157 = vld [vmem:[#allocation5 + $0x50] sm:$0xff]
    %v158 = vld [vmem:[#allocation5 + $0x58] sm:$0xff]
    %v159 = vld [vmem:[#allocation5 + $0x60] sm:$0xff]
    %v160 = vld [vmem:[#allocation5 + $0x68] sm:$0xff]
    %v161 = vld [vmem:[#allocation5 + $0x70] sm:$0xff]
    %v162 = vld [vmem:[#allocation5 + $0x78] sm:$0xff]
    %v163 = vld [vmem:[#allocation5 + $0x80] sm:$0xff]
    %v164 = vld [vmem:[#allocation5 + $0x88] sm:$0xff]
    %v165 = vld [vmem:[#allocation5 + $0x90] sm:$0xff]
    %v166 = vld [vmem:[#allocation5 + $0x98] sm:$0xff]
    %v167 = vld [vmem:[#allocation5 + $0xa0] sm:$0xff]
    %v168 = vld [vmem:[#allocation5 + $0xa8] sm:$0xff]
    %v169 = vld [vmem:[#allocation5 + $0xb0] sm:$0xff]
    %v170 = vld [vmem:[#allocation5 + $0xb8] sm:$0xff]
    %v171 = vld [vmem:[#allocation5 + $0xc0] sm:$0xff]
    %v172 = vld [vmem:[#allocation5 + $0xc8] sm:$0xff]
    %v173 = vld [vmem:[#allocation5 + $0xd0] sm:$0xff]
    %v174 = vld [vmem:[#allocation5 + $0xd8] sm:$0xff]
    %v175 = vld [vmem:[#allocation5 + $0xe0] sm:$0xff]
    %v176 = vld [vmem:[#allocation5 + $0xe8] sm:$0xff]
    %v177 = vld [vmem:[#allocation5 + $0xf0] sm:$0xff]
    %v178 = vld [vmem:[#allocation5 + $0xf8] sm:$0xff]
    %v179 = vld [vmem:[#allocation5 + $0x100] sm:$0xff]
    %v180 = vld [vmem:[#allocation5 + $0x108] sm:$0xff]
    %v181 = vld [vmem:[#allocation5 + $0x110] sm:$0xff]
    %v182 = vld [vmem:[#allocation5 + $0x118] sm:$0xff]
    %v183 = vld [vmem:[#allocation5 + $0x120] sm:$0xff]
    %v184 = vld [vmem:[#allocation5 + $0x128] sm:$0xff]
    %v185 = vld [vmem:[#allocation5 + $0x130] sm:$0xff]
    %v186 = vld [vmem:[#allocation5 + $0x138] sm:$0xff]
    %v187 = vld [vmem:[#allocation5 + $0x140] sm:$0xff]
    %v188 = vld [vmem:[#allocation5 + $0x148] sm:$0xff]
    %v189 = vld [vmem:[#allocation5 + $0x150] sm:$0xff]
    %v190 = vld [vmem:[#allocation5 + $0x158] sm:$0xff]
    %v191 = vld [vmem:[#allocation5 + $0x160] sm:$0xff]
    %v192 = vld [vmem:[#allocation5 + $0x168] sm:$0xff]
    %v193 = vld [vmem:[#allocation5 + $0x170] sm:$0xff]
    %v194 = vld [vmem:[#allocation5 + $0x178] sm:$0xff]
    %v195 = vld [vmem:[#allocation5 + $0x180] sm:$0xff]
    %v196 = vld [vmem:[#allocation5 + $0x188] sm:$0xff]
    %v197 = vld [vmem:[#allocation5 + $0x190] sm:$0xff]
    %v198 = vld [vmem:[#allocation5 + $0x198] sm:$0xff]
    %v199 = vld [vmem:[#allocation5 + $0x1a0] sm:$0xff]
    %v200 = vld [vmem:[#allocation5 + $0x1a8] sm:$0xff]
    %v201 = vld [vmem:[#allocation5 + $0x1b0] sm:$0xff]
    %v202 = vld [vmem:[#allocation5 + $0x1b8] sm:$0xff]
    %v203 = vld [vmem:[#allocation5 + $0x1c0] sm:$0xff]
    %v204 = vld [vmem:[#allocation5 + $0x1c8] sm:$0xff]
    %v205 = vld [vmem:[#allocation5 + $0x1d0] sm:$0xff]
    %v206 = vld [vmem:[#allocation5 + $0x1d8] sm:$0xff]
    %v207 = vld [vmem:[#allocation5 + $0x1e0] sm:$0xff]
    %v208 = vld [vmem:[#allocation5 + $0x1e8] sm:$0xff]
    %v209 = vld [vmem:[#allocation5 + $0x1f0] sm:$0xff]
    %v210 = vld [vmem:[#allocation5 + $0x1f8] sm:$0xff]
    %v211 = vld [vmem:[#allocation5 + $0x200] sm:$0xff]
    %v212 = vld [vmem:[#allocation5 + $0x208] sm:$0xff]
    %v213 = vld [vmem:[#allocation5 + $0x210] sm:$0xff]
    %v214 = vld [vmem:[#allocation5 + $0x218] sm:$0xff]
    %v215 = vld [vmem:[#allocation5 + $0x220] sm:$0xff]
    %v216 = vld [vmem:[#allocation5 + $0x228] sm:$0xff]
    %v217 = vld [vmem:[#allocation5 + $0x230] sm:$0xff]
    %v218 = vld [vmem:[#allocation5 + $0x238] sm:$0xff]
    %v219 = vld [vmem:[#allocation5 + $0x240] sm:$0xff]
    %v220 = vld [vmem:[#allocation5 + $0x248] sm:$0xff]
    %v221 = vld [vmem:[#allocation5 + $0x250] sm:$0xff]
    %v222 = vld [vmem:[#allocation5 + $0x258] sm:$0xff]
    %v223 = vld [vmem:[#allocation5 + $0x260] sm:$0xff]
    %v224 = vld [vmem:[#allocation5 + $0x268] sm:$0xff]
    %v225 = vld [vmem:[#allocation5 + $0x270] sm:$0xff]
    %v226 = vld [vmem:[#allocation5 + $0x278] sm:$0xff]
    %v227 = vld [vmem:[#allocation5 + $0x280] sm:$0xff]
    %v228 = vld [vmem:[#allocation5 + $0x288] sm:$0xff]
    %v229 = vld [vmem:[#allocation5 + $0x290] sm:$0xff]
    %v230 = vld [vmem:[#allocation5 + $0x298] sm:$0xff]
    %v231 = vld [vmem:[#allocation5 + $0x2a0] sm:$0xff]
    %v232 = vld [vmem:[#allocation5 + $0x2a8] sm:$0xff]
    %v233 = vld [vmem:[#allocation5 + $0x2b0] sm:$0xff]
    %v234 = vld [vmem:[#allocation5 + $0x2b8] sm:$0xff]
    %v235 = vld [vmem:[#allocation5 + $0x2c0] sm:$0xff]
    %v236 = vld [vmem:[#allocation5 + $0x2c8] sm:$0xff]
    %v237 = vld [vmem:[#allocation5 + $0x2d0] sm:$0xff]
    %v238 = vld [vmem:[#allocation5 + $0x2d8] sm:$0xff]
    %v239 = vld [vmem:[#allocation5 + $0x2e0] sm:$0xff]
    %v240 = vld [vmem:[#allocation5 + $0x2e8] sm:$0xff]
    %v241 = vld [vmem:[#allocation5 + $0x2f0] sm:$0xff]
    %v242 = vld [vmem:[#allocation5 + $0x2f8] sm:$0xff]
    %v243 = vld [vmem:[%s3] sm:$0x1]
    %v245 = vlaneseq
    %v246 = vshrl.u32 %v245, 7
    %v247 = vsub.s32 0, %v246
    %v248 = vrot.slane %v243, %v247
    %v252 = vcombine.high %v145, %v145
    %v254 = vunpack.c.l.s4 1983009808
    %v255 = vunpack.c.0.s8 %v254
    %v256 = vlaneseq
    %v257 = vshrl.u32 %v256, 7
    %v258 = vsub.s32 %v255, %v257
    %v259 = vrot.slane %v145, %v258
    %v261 = vunpack.c.l.s4 1983009808
    %v262 = vunpack.c.0.s8 %v261
    %v263 = vlaneseq
    %v264 = vshrl.u32 %v263, 7
    %v265 = vsub.s32 %v262, %v264
    %v266 = vrot.slane %v252, %v265
    %v267 = vcombine.high %v259, %v259
    %v268 = vcombine.high %v266, %v266
    %v270 = vunpack.c.l.s4 1983009808
    %v271 = vunpack.c.0.s8 %v270
    %v272 = vlaneseq
    %v273 = vshrl.u32 %v272, 7
    %v274 = vsub.s32 %v271, %v273
    %v275 = vrot.slane %v146, %v274
    %v276 = vcombine.high %v275, %v275
    %283 = vmatprep.subr.mxu0 0.0
    %284 = vmatpush1.msra.mxu0 %v147
    %285 = vmatprep.subr.mxu0 0.0
    %286 = vmatpush1.msra.mxu0 %v148
    %287 = vmatprep.subr.mxu0 0.0
    %288 = vmatpush1.msra.mxu0 %v149
    %289 = vmatprep.subr.mxu0 0.0
    %290 = vmatpush1.msra.mxu0 %v150
    %291 = vmatprep.subr.mxu0 0.0
    %292 = vmatpush1.msra.mxu0 %v151
    %293 = vmatprep.subr.mxu0 0.0
    %294 = vmatpush1.msra.mxu0 %v152
    %295 = vmatprep.subr.mxu0 0.0
    %296 = vmatpush1.msra.mxu0 %v153
    %297 = vmatprep.subr.mxu0 0.0
    %298 = vmatpush1.msra.mxu0 %v154
    %299 = vmatprep.subr.mxu0 0.0
    %300 = vmatpush1.msra.mxu0 %v155
    %301 = vmatprep.subr.mxu0 0.0
    %302 = vmatpush1.msra.mxu0 %v156
    %303 = vmatprep.subr.mxu0 0.0
    %304 = vmatpush1.msra.mxu0 %v157
    %305 = vmatprep.subr.mxu0 0.0
    %306 = vmatpush1.msra.mxu0 %v158
    %307 = vmatprep.subr.mxu0 0.0
    %308 = vmatpush1.msra.mxu0 %v159
    %309 = vmatprep.subr.mxu0 0.0
    %310 = vmatpush1.msra.mxu0 %v160
    %311 = vmatprep.subr.mxu0 0.0
    %312 = vmatpush1.msra.mxu0 %v161
    %313 = vmatprep.subr.mxu0 0.0
    %314 = vmatpush1.msra.mxu0 %v162
    %315 = vmatprep.subr.mxu0 0.0
    %316 = vmatpush1.msra.mxu0 %v163
    %317 = vmatprep.subr.mxu0 0.0
    %318 = vmatpush1.msra.mxu0 %v164
    %319 = vmatprep.subr.mxu0 0.0
    %320 = vmatpush1.msra.mxu0 %v165
    %321 = vmatprep.subr.mxu0 0.0
    %322 = vmatpush1.msra.mxu0 %v166
    %323 = vmatprep.subr.mxu0 0.0
    %324 = vmatpush1.msra.mxu0 %v167
    %325 = vmatprep.subr.mxu0 0.0
    %326 = vmatpush1.msra.mxu0 %v168
    %327 = vmatprep.subr.mxu0 0.0
    %328 = vmatpush1.msra.mxu0 %v169
    %329 = vmatprep.subr.mxu0 0.0
    %330 = vmatpush1.msra.mxu0 %v170
    %331 = vmatprep.subr.mxu0 0.0
    %332 = vmatpush1.msra.mxu0 %v171
    %333 = vmatprep.subr.mxu0 0.0
    %334 = vmatpush1.msra.mxu0 %v172
    %335 = vmatprep.subr.mxu0 0.0
    %336 = vmatpush1.msra.mxu0 %v173
    %337 = vmatprep.subr.mxu0 0.0
    %338 = vmatpush1.msra.mxu0 %v174
    %339 = vmatprep.subr.mxu0 0.0
    %340 = vmatpush1.msra.mxu0 %v175
    %341 = vmatprep.subr.mxu0 0.0
    %342 = vmatpush1.msra.mxu0 %v176
    %343 = vmatprep.subr.mxu0 0.0
    %344 = vmatpush1.msra.mxu0 %v177
    %345 = vmatprep.subr.mxu0 0.0
    %346 = vmatpush1.msra.mxu0 %v178
    %347 = vmatprep.mubr.f32.mxu0 %v267
    %348 = vmatmul.mubr.f32.gmra.mrb[0].mxu0 %v259
    %v349 = vpop.f32.mrb[0].mxu0
    %v350 = vadd.f32 %v248, %v349
    %v351 = vpop.f32.mrb[0].mxu0
    %352 = vdwg.mxu0
    %353 = vmatprep.subr.mxu0 0.0
    %354 = vmatpush1.msra.mxu0 %v179
    %355 = vmatprep.subr.mxu0 0.0
    %356 = vmatpush1.msra.mxu0 %v180
    %357 = vmatprep.subr.mxu0 0.0
    %358 = vmatpush1.msra.mxu0 %v181
    %359 = vmatprep.subr.mxu0 0.0
    %360 = vmatpush1.msra.mxu0 %v182
    %361 = vmatprep.subr.mxu0 0.0
    %362 = vmatpush1.msra.mxu0 %v183
    %363 = vmatprep.subr.mxu0 0.0
    %364 = vmatpush1.msra.mxu0 %v184
    %365 = vmatprep.subr.mxu0 0.0
    %366 = vmatpush1.msra.mxu0 %v185
    %367 = vmatprep.subr.mxu0 0.0
    %368 = vmatpush1.msra.mxu0 %v186
    %369 = vmatprep.subr.mxu0 0.0
    %370 = vmatpush1.msra.mxu0 %v187
    %371 = vmatprep.subr.mxu0 0.0
    %372 = vmatpush1.msra.mxu0 %v188
    %373 = vmatprep.subr.mxu0 0.0
    %374 = vmatpush1.msra.mxu0 %v189
    %375 = vmatprep.subr.mxu0 0.0
    %376 = vmatpush1.msra.mxu0 %v190
    %377 = vmatprep.subr.mxu0 0.0
    %378 = vmatpush1.msra.mxu0 %v191
    %379 = vmatprep.subr.mxu0 0.0
    %380 = vmatpush1.msra.mxu0 %v192
    %381 = vmatprep.subr.mxu0 0.0
    %382 = vmatpush1.msra.mxu0 %v193
    %383 = vmatprep.subr.mxu0 0.0
    %384 = vmatpush1.msra.mxu0 %v194
    %385 = vmatprep.subr.mxu0 0.0
    %386 = vmatpush1.msra.mxu0 %v195
    %387 = vmatprep.subr.mxu0 0.0
    %388 = vmatpush1.msra.mxu0 %v196
    %389 = vmatprep.subr.mxu0 0.0
    %390 = vmatpush1.msra.mxu0 %v197
    %391 = vmatprep.subr.mxu0 0.0
    %392 = vmatpush1.msra.mxu0 %v198
    %393 = vmatprep.subr.mxu0 0.0
    %394 = vmatpush1.msra.mxu0 %v199
    %395 = vmatprep.subr.mxu0 0.0
    %396 = vmatpush1.msra.mxu0 %v200
    %397 = vmatprep.subr.mxu0 0.0
    %398 = vmatpush1.msra.mxu0 %v201
    %399 = vmatprep.subr.mxu0 0.0
    %400 = vmatpush1.msra.mxu0 %v202
    %401 = vmatprep.subr.mxu0 0.0
    %402 = vmatpush1.msra.mxu0 %v203
    %403 = vmatprep.subr.mxu0 0.0
    %404 = vmatpush1.msra.mxu0 %v204
    %405 = vmatprep.subr.mxu0 0.0
    %406 = vmatpush1.msra.mxu0 %v205
    %407 = vmatprep.subr.mxu0 0.0
    %408 = vmatpush1.msra.mxu0 %v206
    %409 = vmatprep.subr.mxu0 0.0
    %410 = vmatpush1.msra.mxu0 %v207
    %411 = vmatprep.subr.mxu0 0.0
    %412 = vmatpush1.msra.mxu0 %v208
    %413 = vmatprep.subr.mxu0 0.0
    %414 = vmatpush1.msra.mxu0 %v209
    %415 = vmatprep.subr.mxu0 0.0
    %416 = vmatpush1.msra.mxu0 %v210
    %417 = vmatprep.mubr.f32.mxu0 %v268
    %418 = vmatmul.mubr.f32.gmra.mrb[0].mxu0 %v266
    %v419 = vpop.f32.mrb[0].mxu0
    %v420 = vadd.f32 %v350, %v419
    %v421 = vpop.f32.mrb[0].mxu0
    %422 = vdwg.mxu0
    %423 = vmatprep.subr.mxu0 0.0
    %424 = vmatpush1.msra.mxu0 %v211
    %425 = vmatprep.subr.mxu0 0.0
    %426 = vmatpush1.msra.mxu0 %v212
    %427 = vmatprep.subr.mxu0 0.0
    %428 = vmatpush1.msra.mxu0 %v213
    %429 = vmatprep.subr.mxu0 0.0
    %430 = vmatpush1.msra.mxu0 %v214
    %431 = vmatprep.subr.mxu0 0.0
    %432 = vmatpush1.msra.mxu0 %v215
    %433 = vmatprep.subr.mxu0 0.0
    %434 = vmatpush1.msra.mxu0 %v216
    %435 = vmatprep.subr.mxu0 0.0
    %436 = vmatpush1.msra.mxu0 %v217
    %437 = vmatprep.subr.mxu0 0.0
    %438 = vmatpush1.msra.mxu0 %v218
    %439 = vmatprep.subr.mxu0 0.0
    %440 = vmatpush1.msra.mxu0 %v219
    %441 = vmatprep.subr.mxu0 0.0
    %442 = vmatpush1.msra.mxu0 %v220
    %443 = vmatprep.subr.mxu0 0.0
    %444 = vmatpush1.msra.mxu0 %v221
    %445 = vmatprep.subr.mxu0 0.0
    %446 = vmatpush1.msra.mxu0 %v222
    %447 = vmatprep.subr.mxu0 0.0
    %448 = vmatpush1.msra.mxu0 %v223
    %449 = vmatprep.subr.mxu0 0.0
    %450 = vmatpush1.msra.mxu0 %v224
    %451 = vmatprep.subr.mxu0 0.0
    %452 = vmatpush1.msra.mxu0 %v225
    %453 = vmatprep.subr.mxu0 0.0
    %454 = vmatpush1.msra.mxu0 %v226
    %455 = vmatprep.subr.mxu0 0.0
    %456 = vmatpush1.msra.mxu0 %v227
    %457 = vmatprep.subr.mxu0 0.0
    %458 = vmatpush1.msra.mxu0 %v228
    %459 = vmatprep.subr.mxu0 0.0
    %460 = vmatpush1.msra.mxu0 %v229
    %461 = vmatprep.subr.mxu0 0.0
    %462 = vmatpush1.msra.mxu0 %v230
    %463 = vmatprep.subr.mxu0 0.0
    %464 = vmatpush1.msra.mxu0 %v231
    %465 = vmatprep.subr.mxu0 0.0
    %466 = vmatpush1.msra.mxu0 %v232
    %467 = vmatprep.subr.mxu0 0.0
    %468 = vmatpush1.msra.mxu0 %v233
    %469 = vmatprep.subr.mxu0 0.0
    %470 = vmatpush1.msra.mxu0 %v234
    %471 = vmatprep.subr.mxu0 0.0
    %472 = vmatpush1.msra.mxu0 %v235
    %473 = vmatprep.subr.mxu0 0.0
    %474 = vmatpush1.msra.mxu0 %v236
    %475 = vmatprep.subr.mxu0 0.0
    %476 = vmatpush1.msra.mxu0 %v237
    %477 = vmatprep.subr.mxu0 0.0
    %478 = vmatpush1.msra.mxu0 %v238
    %479 = vmatprep.subr.mxu0 0.0
    %480 = vmatpush1.msra.mxu0 %v239
    %481 = vmatprep.subr.mxu0 0.0
    %482 = vmatpush1.msra.mxu0 %v240
    %483 = vmatprep.subr.mxu0 0.0
    %484 = vmatpush1.msra.mxu0 %v241
    %485 = vmatprep.subr.mxu0 0.0
    %486 = vmatpush1.msra.mxu0 %v242
    %487 = vmatprep.mubr.f32.mxu0 %v276
    %488 = vmatmul.mubr.f32.gmra.mrb[0].mxu0 %v275
    %v489 = vpop.f32.mrb[0].mxu0
    %v490 = vadd.f32 %v420, %v489
    %v491 = vpop.f32.mrb[0].mxu0
    %492 = vdwg.mxu0
    %v493 = vmax.f32 %v490, 0.0
    %v494 = vld [vmem:[#allocation7] sm:$0xff]
    %v495 = vld [vmem:[#allocation7 + $0x8] sm:$0xff]
    %v496 = vld [vmem:[#allocation7 + $0x10] sm:$0xff]
    %v497 = vld [vmem:[#allocation7 + $0x18] sm:$0xff]
    %v498 = vld [vmem:[#allocation7 + $0x20] sm:$0xff]
    %v499 = vld [vmem:[#allocation7 + $0x28] sm:$0xff]
    %v500 = vld [vmem:[#allocation7 + $0x30] sm:$0xff]
    %v501 = vld [vmem:[#allocation7 + $0x38] sm:$0xff]
    %v502 = vld [vmem:[#allocation7 + $0x40] sm:$0xff]
    %v503 = vld [vmem:[#allocation7 + $0x48] sm:$0xff]
    %v504 = vld [vmem:[#allocation7 + $0x50] sm:$0xff]
    %v505 = vld [vmem:[#allocation7 + $0x58] sm:$0xff]
    %v506 = vld [vmem:[#allocation7 + $0x60] sm:$0xff]
    %v507 = vld [vmem:[#allocation7 + $0x68] sm:$0xff]
    %v508 = vld [vmem:[#allocation7 + $0x70] sm:$0xff]
    %v509 = vld [vmem:[#allocation7 + $0x78] sm:$0xff]
    %v510 = vld [vmem:[%s5] sm:$0x1]
    %v512 = vlaneseq
    %v513 = vshrl.u32 %v512, 7
    %v514 = vsub.s32 0, %v513
    %v515 = vrot.slane %v510, %v514
    %517 = vmatprep.subr.mxu0 0.0
    %518 = vmatpush1.msra.mxu0 %v494
    %519 = vmatprep.subr.mxu0 0.0
    %520 = vmatpush1.msra.mxu0 %v495
    %521 = vmatprep.subr.mxu0 0.0
    %522 = vmatpush1.msra.mxu0 %v496
    %523 = vmatprep.subr.mxu0 0.0
    %524 = vmatpush1.msra.mxu0 %v497
    %525 = vmatprep.subr.mxu0 0.0
    %526 = vmatpush1.msra.mxu0 %v498
    %527 = vmatprep.subr.mxu0 0.0
    %528 = vmatpush1.msra.mxu0 %v499
    %529 = vmatprep.subr.mxu0 0.0
    %530 = vmatpush1.msra.mxu0 %v500
    %531 = vmatprep.subr.mxu0 0.0
    %532 = vmatpush1.msra.mxu0 %v501
    %533 = vmatprep.subr.mxu0 0.0
    %534 = vmatpush1.msra.mxu0 %v502
    %535 = vmatprep.subr.mxu0 0.0
    %536 = vmatpush1.msra.mxu0 %v503
    %537 = vmatprep.subr.mxu0 0.0
    %538 = vmatpush1.msra.mxu0 %v504
    %539 = vmatprep.subr.mxu0 0.0
    %540 = vmatpush1.msra.mxu0 %v505
    %541 = vmatprep.subr.mxu0 0.0
    %542 = vmatpush1.msra.mxu0 %v506
    %543 = vmatprep.subr.mxu0 0.0
    %544 = vmatpush1.msra.mxu0 %v507
    %545 = vmatprep.subr.mxu0 0.0
    %546 = vmatpush1.msra.mxu0 %v508
    %547 = vmatprep.subr.mxu0 0.0
    %548 = vmatpush1.msra.mxu0 %v509
    %549 = vmatprep.subr.mxu0 0.0
    %550 = vmatpush1.msra.mxu0 0.0
    %551 = vmatprep.subr.mxu0 0.0
    %552 = vmatpush1.msra.mxu0 0.0
    %553 = vmatprep.subr.mxu0 0.0
    %554 = vmatpush1.msra.mxu0 0.0
    %555 = vmatprep.subr.mxu0 0.0
    %556 = vmatpush1.msra.mxu0 0.0
    %557 = vmatprep.subr.mxu0 0.0
    %558 = vmatpush1.msra.mxu0 0.0
    %559 = vmatprep.subr.mxu0 0.0
    %560 = vmatpush1.msra.mxu0 0.0
    %561 = vmatprep.subr.mxu0 0.0
    %562 = vmatpush1.msra.mxu0 0.0
    %563 = vmatprep.subr.mxu0 0.0
    %564 = vmatpush1.msra.mxu0 0.0
    %565 = vmatprep.subr.mxu0 0.0
    %566 = vmatpush1.msra.mxu0 0.0
    %567 = vmatprep.subr.mxu0 0.0
    %568 = vmatpush1.msra.mxu0 0.0
    %569 = vmatprep.subr.mxu0 0.0
    %570 = vmatpush1.msra.mxu0 0.0
    %571 = vmatprep.subr.mxu0 0.0
    %572 = vmatpush1.msra.mxu0 0.0
    %573 = vmatprep.subr.mxu0 0.0
    %574 = vmatpush1.msra.mxu0 0.0
    %575 = vmatprep.subr.mxu0 0.0
    %576 = vmatpush1.msra.mxu0 0.0
    %577 = vmatprep.subr.mxu0 0.0
    %578 = vmatpush1.msra.mxu0 0.0
    %579 = vmatprep.subr.mxu0 0.0
    %580 = vmatpush1.msra.mxu0 0.0
    %581 = vmatprep.mubr.f32.mxu0 0.0
    %582 = vmatmul.mubr.f32.gmra.mrb[0].mxu0 %v493
    %v583 = vpop.f32.mrb[0].mxu0
    %v584 = vadd.f32 %v515, %v583
    %v585 = vpop.f32.mrb[0].mxu0
    %586 = vdwg.mxu0
    %v587 = vld [vmem:[#allocation8] sm:$0xff]
    %v588 = vld [vmem:[#allocation8 + $0x8] sm:$0xff]
    %v589 = vld [vmem:[#allocation8 + $0x10] sm:$0xff]
    %v590 = vld [vmem:[#allocation8 + $0x18] sm:$0xff]
    %v591 = vld [vmem:[#allocation8 + $0x20] sm:$0xff]
    %v592 = vld [vmem:[#allocation8 + $0x28] sm:$0xff]
    %v593 = vld [vmem:[#allocation8 + $0x30] sm:$0xff]
    %v594 = vld [vmem:[#allocation8 + $0x38] sm:$0xff]
    %v595 = vld [vmem:[#allocation8 + $0x40] sm:$0xff]
    %v596 = vld [vmem:[#allocation8 + $0x48] sm:$0xff]
    %v597 = vld [vmem:[#allocation8 + $0x50] sm:$0xff]
    %v598 = vld [vmem:[#allocation8 + $0x58] sm:$0xff]
    %v599 = vld [vmem:[#allocation8 + $0x60] sm:$0xff]
    %v600 = vld [vmem:[#allocation8 + $0x68] sm:$0xff]
    %v601 = vld [vmem:[#allocation8 + $0x70] sm:$0xff]
    %v602 = vld [vmem:[#allocation8 + $0x78] sm:$0xff]
    %v603 = vld [vmem:[%s7] sm:$0x1]
    %v605 = vlaneseq
    %v606 = vshrl.u32 %v605, 7
    %v607 = vsub.s32 0, %v606
    %v608 = vrot.slane %v603, %v607
    %610 = vmatprep.subr.mxu0 0.0
    %611 = vmatpush1.msra.mxu0 %v587
    %612 = vmatprep.subr.mxu0 0.0
    %613 = vmatpush1.msra.mxu0 %v588
    %614 = vmatprep.subr.mxu0 0.0
    %615 = vmatpush1.msra.mxu0 %v589
    %616 = vmatprep.subr.mxu0 0.0
    %617 = vmatpush1.msra.mxu0 %v590
    %618 = vmatprep.subr.mxu0 0.0
    %619 = vmatpush1.msra.mxu0 %v591
    %620 = vmatprep.subr.mxu0 0.0
    %621 = vmatpush1.msra.mxu0 %v592
    %622 = vmatprep.subr.mxu0 0.0
    %623 = vmatpush1.msra.mxu0 %v593
    %624 = vmatprep.subr.mxu0 0.0
    %625 = vmatpush1.msra.mxu0 %v594
    %626 = vmatprep.subr.mxu0 0.0
    %627 = vmatpush1.msra.mxu0 %v595
    %628 = vmatprep.subr.mxu0 0.0
    %629 = vmatpush1.msra.mxu0 %v596
    %630 = vmatprep.subr.mxu0 0.0
    %631 = vmatpush1.msra.mxu0 %v597
    %632 = vmatprep.subr.mxu0 0.0
    %633 = vmatpush1.msra.mxu0 %v598
    %634 = vmatprep.subr.mxu0 0.0
    %635 = vmatpush1.msra.mxu0 %v599
    %636 = vmatprep.subr.mxu0 0.0
    %637 = vmatpush1.msra.mxu0 %v600
    %638 = vmatprep.subr.mxu0 0.0
    %639 = vmatpush1.msra.mxu0 %v601
    %640 = vmatprep.subr.mxu0 0.0
    %641 = vmatpush1.msra.mxu0 %v602
    %642 = vmatprep.subr.mxu0 0.0
    %643 = vmatpush1.msra.mxu0 0.0
    %644 = vmatprep.subr.mxu0 0.0
    %645 = vmatpush1.msra.mxu0 0.0
    %646 = vmatprep.subr.mxu0 0.0
    %647 = vmatpush1.msra.mxu0 0.0
    %648 = vmatprep.subr.mxu0 0.0
    %649 = vmatpush1.msra.mxu0 0.0
    %650 = vmatprep.subr.mxu0 0.0
    %651 = vmatpush1.msra.mxu0 0.0
    %652 = vmatprep.subr.mxu0 0.0
    %653 = vmatpush1.msra.mxu0 0.0
    %654 = vmatprep.subr.mxu0 0.0
    %655 = vmatpush1.msra.mxu0 0.0
    %656 = vmatprep.subr.mxu0 0.0
    %657 = vmatpush1.msra.mxu0 0.0
    %658 = vmatprep.subr.mxu0 0.0
    %659 = vmatpush1.msra.mxu0 0.0
    %660 = vmatprep.subr.mxu0 0.0
    %661 = vmatpush1.msra.mxu0 0.0
    %662 = vmatprep.subr.mxu0 0.0
    %663 = vmatpush1.msra.mxu0 0.0
    %664 = vmatprep.subr.mxu0 0.0
    %665 = vmatpush1.msra.mxu0 0.0
    %666 = vmatprep.subr.mxu0 0.0
    %667 = vmatpush1.msra.mxu0 0.0
    %668 = vmatprep.subr.mxu0 0.0
    %669 = vmatpush1.msra.mxu0 0.0
    %670 = vmatprep.subr.mxu0 0.0
    %671 = vmatpush1.msra.mxu0 0.0
    %672 = vmatprep.subr.mxu0 0.0
    %673 = vmatpush1.msra.mxu0 0.0
    %674 = vmatprep.mubr.f32.mxu0 0.0
    %675 = vmatmul.mubr.f32.gmra.mrb[0].mxu0 %v584
    %v676 = vpop.f32.mrb[0].mxu0
    %v677 = vadd.f32 %v608, %v676
    %v678 = vpop.f32.mrb[0].mxu0
    %679 = vdwg.mxu0
    %v680 = vld [vmem:[#allocation10] sm:$0xff]
    %v681 = vld [vmem:[#allocation10 + $0x8] sm:$0xff]
    %v682 = vld [vmem:[#allocation10 + $0x10] sm:$0xff]
    %v683 = vld [vmem:[#allocation10 + $0x18] sm:$0xff]
    %v684 = vld [vmem:[#allocation10 + $0x20] sm:$0xff]
    %v685 = vld [vmem:[#allocation10 + $0x28] sm:$0xff]
    %v686 = vld [vmem:[#allocation10 + $0x30] sm:$0xff]
    %v687 = vld [vmem:[#allocation10 + $0x38] sm:$0xff]
    %v688 = vld [vmem:[#allocation10 + $0x40] sm:$0xff]
    %v689 = vld [vmem:[#allocation10 + $0x48] sm:$0xff]
    %v690 = vld [vmem:[#allocation10 + $0x50] sm:$0xff]
    %v691 = vld [vmem:[#allocation10 + $0x58] sm:$0xff]
    %v692 = vld [vmem:[#allocation10 + $0x60] sm:$0xff]
    %v693 = vld [vmem:[#allocation10 + $0x68] sm:$0xff]
    %v694 = vld [vmem:[#allocation10 + $0x70] sm:$0xff]
    %v695 = vld [vmem:[#allocation10 + $0x78] sm:$0xff]
    %v696 = vld [vmem:[%s9] sm:$0x1]
    %v698 = vlaneseq
    %v699 = vshrl.u32 %v698, 7
    %v700 = vsub.s32 0, %v699
    %v701 = vrot.slane %v696, %v700
    %703 = vmatprep.subr.mxu0 0.0
    %704 = vmatpush1.msra.mxu0 %v680
    %705 = vmatprep.subr.mxu0 0.0
    %706 = vmatpush1.msra.mxu0 %v681
    %707 = vmatprep.subr.mxu0 0.0
    %708 = vmatpush1.msra.mxu0 %v682
    %709 = vmatprep.subr.mxu0 0.0
    %710 = vmatpush1.msra.mxu0 %v683
    %711 = vmatprep.subr.mxu0 0.0
    %712 = vmatpush1.msra.mxu0 %v684
    %713 = vmatprep.subr.mxu0 0.0
    %714 = vmatpush1.msra.mxu0 %v685
    %715 = vmatprep.subr.mxu0 0.0
    %716 = vmatpush1.msra.mxu0 %v686
    %717 = vmatprep.subr.mxu0 0.0
    %718 = vmatpush1.msra.mxu0 %v687
    %719 = vmatprep.subr.mxu0 0.0
    %720 = vmatpush1.msra.mxu0 %v688
    %721 = vmatprep.subr.mxu0 0.0
    %722 = vmatpush1.msra.mxu0 %v689
    %723 = vmatprep.subr.mxu0 0.0
    %724 = vmatpush1.msra.mxu0 %v690
    %725 = vmatprep.subr.mxu0 0.0
    %726 = vmatpush1.msra.mxu0 %v691
    %727 = vmatprep.subr.mxu0 0.0
    %728 = vmatpush1.msra.mxu0 %v692
    %729 = vmatprep.subr.mxu0 0.0
    %730 = vmatpush1.msra.mxu0 %v693
    %731 = vmatprep.subr.mxu0 0.0
    %732 = vmatpush1.msra.mxu0 %v694
    %733 = vmatprep.subr.mxu0 0.0
    %734 = vmatpush1.msra.mxu0 %v695
    %735 = vmatprep.subr.mxu0 0.0
    %736 = vmatpush1.msra.mxu0 0.0
    %737 = vmatprep.subr.mxu0 0.0
    %738 = vmatpush1.msra.mxu0 0.0
    %739 = vmatprep.subr.mxu0 0.0
    %740 = vmatpush1.msra.mxu0 0.0
    %741 = vmatprep.subr.mxu0 0.0
    %742 = vmatpush1.msra.mxu0 0.0
    %743 = vmatprep.subr.mxu0 0.0
    %744 = vmatpush1.msra.mxu0 0.0
    %745 = vmatprep.subr.mxu0 0.0
    %746 = vmatpush1.msra.mxu0 0.0
    %747 = vmatprep.subr.mxu0 0.0
    %748 = vmatpush1.msra.mxu0 0.0
    %749 = vmatprep.subr.mxu0 0.0
    %750 = vmatpush1.msra.mxu0 0.0
    %751 = vmatprep.subr.mxu0 0.0
    %752 = vmatpush1.msra.mxu0 0.0
    %753 = vmatprep.subr.mxu0 0.0
    %754 = vmatpush1.msra.mxu0 0.0
    %755 = vmatprep.subr.mxu0 0.0
    %756 = vmatpush1.msra.mxu0 0.0
    %757 = vmatprep.subr.mxu0 0.0
    %758 = vmatpush1.msra.mxu0 0.0
    %759 = vmatprep.subr.mxu0 0.0
    %760 = vmatpush1.msra.mxu0 0.0
    %761 = vmatprep.subr.mxu0 0.0
    %762 = vmatpush1.msra.mxu0 0.0
    %763 = vmatprep.subr.mxu0 0.0
    %764 = vmatpush1.msra.mxu0 0.0
    %765 = vmatprep.subr.mxu0 0.0
    %766 = vmatpush1.msra.mxu0 0.0
    %767 = vmatprep.mubr.f32.mxu0 0.0
    %768 = vmatmul.mubr.f32.gmra.mrb[0].mxu0 %v584
    %v769 = vpop.f32.mrb[0].mxu0
    %v770 = vadd.f32 %v701, %v769
    %v771 = vpop.f32.mrb[0].mxu0
    %772 = vdwg.mxu0
    %v773 = vmul.f32 %v770, 0.5
    %v774 = vmul.f32 %v773, 1.442695
    %v775 = vpow.pop %v774
    %v776 = vld [vmem:[%s1] sm:$0x1]
    %v778 = vlaneseq
    %v779 = vshrl.u32 %v778, 7
    %v780 = vsub.s32 0, %v779
    %v781 = vrot.slane %v776, %v780
    %v783 = vmul.f32 %v781, %v775
    %v784 = vadd.f32 %v677, %v783
    %v785 = vld [vmem:[#allocation11] sm:$0xff]
    %v786 = vld [vmem:[#allocation11 + $0x8] sm:$0xff]
    %v787 = vld [vmem:[#allocation11 + $0x10] sm:$0xff]
    %v788 = vld [vmem:[#allocation11 + $0x18] sm:$0xff]
    %v789 = vld [vmem:[#allocation11 + $0x20] sm:$0xff]
    %v790 = vld [vmem:[#allocation11 + $0x28] sm:$0xff]
    %v791 = vld [vmem:[#allocation11 + $0x30] sm:$0xff]
    %v792 = vld [vmem:[#allocation11 + $0x38] sm:$0xff]
    %v793 = vld [vmem:[#allocation11 + $0x40] sm:$0xff]
    %v794 = vld [vmem:[#allocation11 + $0x48] sm:$0xff]
    %v795 = vld [vmem:[#allocation11 + $0x50] sm:$0xff]
    %v796 = vld [vmem:[#allocation11 + $0x58] sm:$0xff]
    %v797 = vld [vmem:[#allocation11 + $0x60] sm:$0xff]
    %v798 = vld [vmem:[#allocation11 + $0x68] sm:$0xff]
    %v799 = vld [vmem:[#allocation11 + $0x70] sm:$0xff]
    %v800 = vld [vmem:[#allocation11 + $0x78] sm:$0xff]
    %v801 = vld [vmem:[%s11] sm:$0x1]
    %v803 = vlaneseq
    %v804 = vshrl.u32 %v803, 7
    %v805 = vsub.s32 0, %v804
    %v806 = vrot.slane %v801, %v805
    %808 = vmatprep.subr.mxu0 0.0
    %809 = vmatpush1.msra.mxu0 %v785
    %810 = vmatprep.subr.mxu0 0.0
    %811 = vmatpush1.msra.mxu0 %v786
    %812 = vmatprep.subr.mxu0 0.0
    %813 = vmatpush1.msra.mxu0 %v787
    %814 = vmatprep.subr.mxu0 0.0
    %815 = vmatpush1.msra.mxu0 %v788
    %816 = vmatprep.subr.mxu0 0.0
    %817 = vmatpush1.msra.mxu0 %v789
    %818 = vmatprep.subr.mxu0 0.0
    %819 = vmatpush1.msra.mxu0 %v790
    %820 = vmatprep.subr.mxu0 0.0
    %821 = vmatpush1.msra.mxu0 %v791
    %822 = vmatprep.subr.mxu0 0.0
    %823 = vmatpush1.msra.mxu0 %v792
    %824 = vmatprep.subr.mxu0 0.0
    %825 = vmatpush1.msra.mxu0 %v793
    %826 = vmatprep.subr.mxu0 0.0
    %827 = vmatpush1.msra.mxu0 %v794
    %828 = vmatprep.subr.mxu0 0.0
    %829 = vmatpush1.msra.mxu0 %v795
    %830 = vmatprep.subr.mxu0 0.0
    %831 = vmatpush1.msra.mxu0 %v796
    %832 = vmatprep.subr.mxu0 0.0
    %833 = vmatpush1.msra.mxu0 %v797
    %834 = vmatprep.subr.mxu0 0.0
    %835 = vmatpush1.msra.mxu0 %v798
    %836 = vmatprep.subr.mxu0 0.0
    %837 = vmatpush1.msra.mxu0 %v799
    %838 = vmatprep.subr.mxu0 0.0
    %839 = vmatpush1.msra.mxu0 %v800
    %840 = vmatprep.subr.mxu0 0.0
    %841 = vmatpush1.msra.mxu0 0.0
    %842 = vmatprep.subr.mxu0 0.0
    %843 = vmatpush1.msra.mxu0 0.0
    %844 = vmatprep.subr.mxu0 0.0
    %845 = vmatpush1.msra.mxu0 0.0
    %846 = vmatprep.subr.mxu0 0.0
    %847 = vmatpush1.msra.mxu0 0.0
    %848 = vmatprep.subr.mxu0 0.0
    %849 = vmatpush1.msra.mxu0 0.0
    %850 = vmatprep.subr.mxu0 0.0
    %851 = vmatpush1.msra.mxu0 0.0
    %852 = vmatprep.subr.mxu0 0.0
    %853 = vmatpush1.msra.mxu0 0.0
    %854 = vmatprep.subr.mxu0 0.0
    %855 = vmatpush1.msra.mxu0 0.0
    %856 = vmatprep.subr.mxu0 0.0
    %857 = vmatpush1.msra.mxu0 0.0
    %858 = vmatprep.subr.mxu0 0.0
    %859 = vmatpush1.msra.mxu0 0.0
    %860 = vmatprep.subr.mxu0 0.0
    %861 = vmatpush1.msra.mxu0 0.0
    %862 = vmatprep.subr.mxu0 0.0
    %863 = vmatpush1.msra.mxu0 0.0
    %864 = vmatprep.subr.mxu0 0.0
    %865 = vmatpush1.msra.mxu0 0.0
    %866 = vmatprep.subr.mxu0 0.0
    %867 = vmatpush1.msra.mxu0 0.0
    %868 = vmatprep.subr.mxu0 0.0
    %869 = vmatpush1.msra.mxu0 0.0
    %870 = vmatprep.subr.mxu0 0.0
    %871 = vmatpush1.msra.mxu0 0.0
    %872 = vmatprep.mubr.f32.mxu0 0.0
    %873 = vmatmul.mubr.f32.gmra.mrb[0].mxu0 %v784
    %v874 = vpop.f32.mrb[0].mxu0
    %v875 = vadd.f32 %v806, %v874
    %v876 = vpop.f32.mrb[0].mxu0
    %877 = vdwg.mxu0
    %v878 = vmax.f32 %v875, 0.0
    %v879 = vld [vmem:[#allocation13] sm:$0xff]
    %v880 = vld [vmem:[#allocation13 + $0x8] sm:$0xff]
    %v881 = vld [vmem:[#allocation13 + $0x10] sm:$0xff]
    %v882 = vld [vmem:[#allocation13 + $0x18] sm:$0xff]
    %v883 = vld [vmem:[#allocation13 + $0x20] sm:$0xff]
    %v884 = vld [vmem:[#allocation13 + $0x28] sm:$0xff]
    %v885 = vld [vmem:[#allocation13 + $0x30] sm:$0xff]
    %v886 = vld [vmem:[#allocation13 + $0x38] sm:$0xff]
    %v887 = vld [vmem:[#allocation13 + $0x40] sm:$0xff]
    %v888 = vld [vmem:[#allocation13 + $0x48] sm:$0xff]
    %v889 = vld [vmem:[#allocation13 + $0x50] sm:$0xff]
    %v890 = vld [vmem:[#allocation13 + $0x58] sm:$0xff]
    %v891 = vld [vmem:[#allocation13 + $0x60] sm:$0xff]
    %v892 = vld [vmem:[#allocation13 + $0x68] sm:$0xff]
    %v893 = vld [vmem:[#allocation13 + $0x70] sm:$0xff]
    %v894 = vld [vmem:[#allocation13 + $0x78] sm:$0xff]
    %v895 = vld [vmem:[#allocation13 + $0x80] sm:$0xff]
    %v896 = vld [vmem:[#allocation13 + $0x88] sm:$0xff]
    %v897 = vld [vmem:[#allocation13 + $0x90] sm:$0xff]
    %v898 = vld [vmem:[#allocation13 + $0x98] sm:$0xff]
    %v899 = vld [vmem:[#allocation13 + $0xa0] sm:$0xff]
    %v900 = vld [vmem:[#allocation13 + $0xa8] sm:$0xff]
    %v901 = vld [vmem:[#allocation13 + $0xb0] sm:$0xff]
    %v902 = vld [vmem:[#allocation13 + $0xb8] sm:$0xff]
    %v903 = vld [vmem:[#allocation13 + $0xc0] sm:$0xff]
    %v904 = vld [vmem:[#allocation13 + $0xc8] sm:$0xff]
    %v905 = vld [vmem:[#allocation13 + $0xd0] sm:$0xff]
    %v906 = vld [vmem:[#allocation13 + $0xd8] sm:$0xff]
    %v907 = vld [vmem:[#allocation13 + $0xe0] sm:$0xff]
    %v908 = vld [vmem:[#allocation13 + $0xe8] sm:$0xff]
    %v909 = vld [vmem:[#allocation13 + $0xf0] sm:$0xff]
    %v910 = vld [vmem:[#allocation13 + $0xf8] sm:$0xff]
    %v911 = vld [vmem:[#allocation13 + $0x100] sm:$0xff]
    %v912 = vld [vmem:[#allocation13 + $0x108] sm:$0xff]
    %v913 = vld [vmem:[#allocation13 + $0x110] sm:$0xff]
    %v914 = vld [vmem:[#allocation13 + $0x118] sm:$0xff]
    %v915 = vld [vmem:[#allocation13 + $0x120] sm:$0xff]
    %v916 = vld [vmem:[#allocation13 + $0x128] sm:$0xff]
    %v917 = vld [vmem:[#allocation13 + $0x130] sm:$0xff]
    %v918 = vld [vmem:[#allocation13 + $0x138] sm:$0xff]
    %v919 = vld [vmem:[#allocation13 + $0x140] sm:$0xff]
    %v920 = vld [vmem:[#allocation13 + $0x148] sm:$0xff]
    %v921 = vld [vmem:[#allocation13 + $0x150] sm:$0xff]
    %v922 = vld [vmem:[#allocation13 + $0x158] sm:$0xff]
    %v923 = vld [vmem:[#allocation13 + $0x160] sm:$0xff]
    %v924 = vld [vmem:[#allocation13 + $0x168] sm:$0xff]
    %v925 = vld [vmem:[#allocation13 + $0x170] sm:$0xff]
    %v926 = vld [vmem:[#allocation13 + $0x178] sm:$0xff]
    %v927 = vld [vmem:[#allocation13 + $0x180] sm:$0xff]
    %v928 = vld [vmem:[#allocation13 + $0x188] sm:$0xff]
    %v929 = vld [vmem:[#allocation13 + $0x190] sm:$0xff]
    %v930 = vld [vmem:[#allocation13 + $0x198] sm:$0xff]
    %v931 = vld [vmem:[#allocation13 + $0x1a0] sm:$0xff]
    %v932 = vld [vmem:[#allocation13 + $0x1a8] sm:$0xff]
    %v933 = vld [vmem:[#allocation13 + $0x1b0] sm:$0xff]
    %v934 = vld [vmem:[#allocation13 + $0x1b8] sm:$0xff]
    %v935 = vld [vmem:[#allocation13 + $0x1c0] sm:$0xff]
    %v936 = vld [vmem:[#allocation13 + $0x1c8] sm:$0xff]
    %v937 = vld [vmem:[#allocation13 + $0x1d0] sm:$0xff]
    %v938 = vld [vmem:[#allocation13 + $0x1d8] sm:$0xff]
    %v939 = vld [vmem:[#allocation13 + $0x1e0] sm:$0xff]
    %v940 = vld [vmem:[#allocation13 + $0x1e8] sm:$0xff]
    %v941 = vld [vmem:[#allocation13 + $0x1f0] sm:$0xff]
    %v942 = vld [vmem:[#allocation13 + $0x1f8] sm:$0xff]
    %v943 = vld [vmem:[#allocation13 + $0x200] sm:$0xff]
    %v944 = vld [vmem:[#allocation13 + $0x208] sm:$0xff]
    %v945 = vld [vmem:[#allocation13 + $0x210] sm:$0xff]
    %v946 = vld [vmem:[#allocation13 + $0x218] sm:$0xff]
    %v947 = vld [vmem:[#allocation13 + $0x220] sm:$0xff]
    %v948 = vld [vmem:[#allocation13 + $0x228] sm:$0xff]
    %v949 = vld [vmem:[#allocation13 + $0x230] sm:$0xff]
    %v950 = vld [vmem:[#allocation13 + $0x238] sm:$0xff]
    %v951 = vld [vmem:[#allocation13 + $0x240] sm:$0xff]
    %v952 = vld [vmem:[#allocation13 + $0x248] sm:$0xff]
    %v953 = vld [vmem:[#allocation13 + $0x250] sm:$0xff]
    %v954 = vld [vmem:[#allocation13 + $0x258] sm:$0xff]
    %v955 = vld [vmem:[#allocation13 + $0x260] sm:$0xff]
    %v956 = vld [vmem:[#allocation13 + $0x268] sm:$0xff]
    %v957 = vld [vmem:[#allocation13 + $0x270] sm:$0xff]
    %v958 = vld [vmem:[#allocation13 + $0x278] sm:$0xff]
    %v959 = vld [vmem:[#allocation13 + $0x280] sm:$0xff]
    %v960 = vld [vmem:[#allocation13 + $0x288] sm:$0xff]
    %v961 = vld [vmem:[#allocation13 + $0x290] sm:$0xff]
    %v962 = vld [vmem:[#allocation13 + $0x298] sm:$0xff]
    %v963 = vld [vmem:[#allocation13 + $0x2a0] sm:$0xff]
    %v964 = vld [vmem:[#allocation13 + $0x2a8] sm:$0xff]
    %v965 = vld [vmem:[#allocation13 + $0x2b0] sm:$0xff]
    %v966 = vld [vmem:[#allocation13 + $0x2b8] sm:$0xff]
    %v967 = vld [vmem:[#allocation13 + $0x2c0] sm:$0xff]
    %v968 = vld [vmem:[#allocation13 + $0x2c8] sm:$0xff]
    %v969 = vld [vmem:[#allocation13 + $0x2d0] sm:$0xff]
    %v970 = vld [vmem:[#allocation13 + $0x2d8] sm:$0xff]
    %v971 = vld [vmem:[#allocation13 + $0x2e0] sm:$0xff]
    %v972 = vld [vmem:[#allocation13 + $0x2e8] sm:$0xff]
    %v973 = vld [vmem:[#allocation13 + $0x2f0] sm:$0xff]
    %v974 = vld [vmem:[#allocation13 + $0x2f8] sm:$0xff]
    %v975 = vld [vmem:[%s13] sm:$0x3f]
    %v977 = vlaneseq
    %v978 = vshrl.u32 %v977, 7
    %v979 = vsub.s32 0, %v978
    %v980 = vrot.slane %v975, %v979
    %v981 = vlaneseq
    %v982 = vshrl.u32 %v981, 7
    %v983 = vsub.s32 1, %v982
    %v984 = vrot.slane %v975, %v983
    %v985 = vlaneseq
    %v986 = vshrl.u32 %v985, 7
    %v987 = vsub.s32 2, %v986
    %v988 = vrot.slane %v975, %v987
    %v989 = vlaneseq
    %v990 = vshrl.u32 %v989, 7
    %v991 = vsub.s32 3, %v990
    %v992 = vrot.slane %v975, %v991
    %v993 = vlaneseq
    %v994 = vshrl.u32 %v993, 7
    %v995 = vsub.s32 4, %v994
    %v996 = vrot.slane %v975, %v995
    %v997 = vlaneseq
    %v998 = vshrl.u32 %v997, 7
    %v999 = vsub.s32 5, %v998
    %v1000 = vrot.slane %v975, %v999
    %1007 = vmatprep.subr.mxu0 %v880
    %1008 = vmatpush1.msra.mxu0 %v879
    %1009 = vmatprep.subr.mxu0 %v886
    %1010 = vmatpush1.msra.mxu0 %v885
    %1011 = vmatprep.subr.mxu0 %v892
    %1012 = vmatpush1.msra.mxu0 %v891
    %1013 = vmatprep.subr.mxu0 %v898
    %1014 = vmatpush1.msra.mxu0 %v897
    %1015 = vmatprep.subr.mxu0 %v904
    %1016 = vmatpush1.msra.mxu0 %v903
    %1017 = vmatprep.subr.mxu0 %v910
    %1018 = vmatpush1.msra.mxu0 %v909
    %1019 = vmatprep.subr.mxu0 %v916
    %1020 = vmatpush1.msra.mxu0 %v915
    %1021 = vmatprep.subr.mxu0 %v922
    %1022 = vmatpush1.msra.mxu0 %v921
    %1023 = vmatprep.subr.mxu0 %v928
    %1024 = vmatpush1.msra.mxu0 %v927
    %1025 = vmatprep.subr.mxu0 %v934
    %1026 = vmatpush1.msra.mxu0 %v933
    %1027 = vmatprep.subr.mxu0 %v940
    %1028 = vmatpush1.msra.mxu0 %v939
    %1029 = vmatprep.subr.mxu0 %v946
    %1030 = vmatpush1.msra.mxu0 %v945
    %1031 = vmatprep.subr.mxu0 %v952
    %1032 = vmatpush1.msra.mxu0 %v951
    %1033 = vmatprep.subr.mxu0 %v958
    %1034 = vmatpush1.msra.mxu0 %v957
    %1035 = vmatprep.subr.mxu0 %v964
    %1036 = vmatpush1.msra.mxu0 %v963
    %1037 = vmatprep.subr.mxu0 %v970
    %1038 = vmatpush1.msra.mxu0 %v969
    %1039 = vmatprep.subr.mxu0 0.0
    %1040 = vmatpush1.msra.mxu0 0.0
    %1041 = vmatprep.subr.mxu0 0.0
    %1042 = vmatpush1.msra.mxu0 0.0
    %1043 = vmatprep.subr.mxu0 0.0
    %1044 = vmatpush1.msra.mxu0 0.0
    %1045 = vmatprep.subr.mxu0 0.0
    %1046 = vmatpush1.msra.mxu0 0.0
    %1047 = vmatprep.subr.mxu0 0.0
    %1048 = vmatpush1.msra.mxu0 0.0
    %1049 = vmatprep.subr.mxu0 0.0
    %1050 = vmatpush1.msra.mxu0 0.0
    %1051 = vmatprep.subr.mxu0 0.0
    %1052 = vmatpush1.msra.mxu0 0.0
    %1053 = vmatprep.subr.mxu0 0.0
    %1054 = vmatpush1.msra.mxu0 0.0
    %1055 = vmatprep.subr.mxu0 0.0
    %1056 = vmatpush1.msra.mxu0 0.0
    %1057 = vmatprep.subr.mxu0 0.0
    %1058 = vmatpush1.msra.mxu0 0.0
    %1059 = vmatprep.subr.mxu0 0.0
    %1060 = vmatpush1.msra.mxu0 0.0
    %1061 = vmatprep.subr.mxu0 0.0
    %1062 = vmatpush1.msra.mxu0 0.0
    %1063 = vmatprep.subr.mxu0 0.0
    %1064 = vmatpush1.msra.mxu0 0.0
    %1065 = vmatprep.subr.mxu0 0.0
    %1066 = vmatpush1.msra.mxu0 0.0
    %1067 = vmatprep.subr.mxu0 0.0
    %1068 = vmatpush1.msra.mxu0 0.0
    %1069 = vmatprep.subr.mxu0 0.0
    %1070 = vmatpush1.msra.mxu0 0.0
    %1071 = vmatprep.mubr.f32.mxu0 0.0
    %1072 = vmatmul.mubr.f32.gmra.mrb[0].mxu0 %v878
    %v1073 = vpop.f32.mrb[0].mxu0
    %v1074 = vadd.f32 %v980, %v1073
    %v1075 = vpop.f32.mrb[0].mxu0
    %v1076 = vadd.f32 %v984, %v1075
    %1077 = vdwg.mxu0
    %1078 = vmatprep.subr.mxu0 %v882
    %1079 = vmatpush1.msra.mxu0 %v881
    %1080 = vmatprep.subr.mxu0 %v888
    %1081 = vmatpush1.msra.mxu0 %v887
    %1082 = vmatprep.subr.mxu0 %v894
    %1083 = vmatpush1.msra.mxu0 %v893
    %1084 = vmatprep.subr.mxu0 %v900
    %1085 = vmatpush1.msra.mxu0 %v899
    %1086 = vmatprep.subr.mxu0 %v906
    %1087 = vmatpush1.msra.mxu0 %v905
    %1088 = vmatprep.subr.mxu0 %v912
    %1089 = vmatpush1.msra.mxu0 %v911
    %1090 = vmatprep.subr.mxu0 %v918
    %1091 = vmatpush1.msra.mxu0 %v917
    %1092 = vmatprep.subr.mxu0 %v924
    %1093 = vmatpush1.msra.mxu0 %v923
    %1094 = vmatprep.subr.mxu0 %v930
    %1095 = vmatpush1.msra.mxu0 %v929
    %1096 = vmatprep.subr.mxu0 %v936
    %1097 = vmatpush1.msra.mxu0 %v935
    %1098 = vmatprep.subr.mxu0 %v942
    %1099 = vmatpush1.msra.mxu0 %v941
    %1100 = vmatprep.subr.mxu0 %v948
    %1101 = vmatpush1.msra.mxu0 %v947
    %1102 = vmatprep.subr.mxu0 %v954
    %1103 = vmatpush1.msra.mxu0 %v953
    %1104 = vmatprep.subr.mxu0 %v960
    %1105 = vmatpush1.msra.mxu0 %v959
    %1106 = vmatprep.subr.mxu0 %v966
    %1107 = vmatpush1.msra.mxu0 %v965
    %1108 = vmatprep.subr.mxu0 %v972
    %1109 = vmatpush1.msra.mxu0 %v971
    %1110 = vmatprep.subr.mxu0 0.0
    %1111 = vmatpush1.msra.mxu0 0.0
    %1112 = vmatprep.subr.mxu0 0.0
    %1113 = vmatpush1.msra.mxu0 0.0
    %1114 = vmatprep.subr.mxu0 0.0
    %1115 = vmatpush1.msra.mxu0 0.0
    %1116 = vmatprep.subr.mxu0 0.0
    %1117 = vmatpush1.msra.mxu0 0.0
    %1118 = vmatprep.subr.mxu0 0.0
    %1119 = vmatpush1.msra.mxu0 0.0
    %1120 = vmatprep.subr.mxu0 0.0
    %1121 = vmatpush1.msra.mxu0 0.0
    %1122 = vmatprep.subr.mxu0 0.0
    %1123 = vmatpush1.msra.mxu0 0.0
    %1124 = vmatprep.subr.mxu0 0.0
    %1125 = vmatpush1.msra.mxu0 0.0
    %1126 = vmatprep.subr.mxu0 0.0
    %1127 = vmatpush1.msra.mxu0 0.0
    %1128 = vmatprep.subr.mxu0 0.0
    %1129 = vmatpush1.msra.mxu0 0.0
    %1130 = vmatprep.subr.mxu0 0.0
    %1131 = vmatpush1.msra.mxu0 0.0
    %1132 = vmatprep.subr.mxu0 0.0
    %1133 = vmatpush1.msra.mxu0 0.0
    %1134 = vmatprep.subr.mxu0 0.0
    %1135 = vmatpush1.msra.mxu0 0.0
    %1136 = vmatprep.subr.mxu0 0.0
    %1137 = vmatpush1.msra.mxu0 0.0
    %1138 = vmatprep.subr.mxu0 0.0
    %1139 = vmatpush1.msra.mxu0 0.0
    %1140 = vmatprep.subr.mxu0 0.0
    %1141 = vmatpush1.msra.mxu0 0.0
    %1142 = vmatprep.mubr.f32.mxu0 0.0
    %1143 = vmatmul.mubr.f32.gmra.mrb[0].mxu0 %v878
    %v1144 = vpop.f32.mrb[0].mxu0
    %v1145 = vadd.f32 %v988, %v1144
    %v1146 = vpop.f32.mrb[0].mxu0
    %v1147 = vadd.f32 %v992, %v1146
    %1148 = vdwg.mxu0
    %1149 = vmatprep.subr.mxu0 %v884
    %1150 = vmatpush1.msra.mxu0 %v883
    %1151 = vmatprep.subr.mxu0 %v890
    %1152 = vmatpush1.msra.mxu0 %v889
    %1153 = vmatprep.subr.mxu0 %v896
    %1154 = vmatpush1.msra.mxu0 %v895
    %1155 = vmatprep.subr.mxu0 %v902
    %1156 = vmatpush1.msra.mxu0 %v901
    %1157 = vmatprep.subr.mxu0 %v908
    %1158 = vmatpush1.msra.mxu0 %v907
    %1159 = vmatprep.subr.mxu0 %v914
    %1160 = vmatpush1.msra.mxu0 %v913
    %1161 = vmatprep.subr.mxu0 %v920
    %1162 = vmatpush1.msra.mxu0 %v919
    %1163 = vmatprep.subr.mxu0 %v926
    %1164 = vmatpush1.msra.mxu0 %v925
    %1165 = vmatprep.subr.mxu0 %v932
    %1166 = vmatpush1.msra.mxu0 %v931
    %1167 = vmatprep.subr.mxu0 %v938
    %1168 = vmatpush1.msra.mxu0 %v937
    %1169 = vmatprep.subr.mxu0 %v944
    %1170 = vmatpush1.msra.mxu0 %v943
    %1171 = vmatprep.subr.mxu0 %v950
    %1172 = vmatpush1.msra.mxu0 %v949
    %1173 = vmatprep.subr.mxu0 %v956
    %1174 = vmatpush1.msra.mxu0 %v955
    %1175 = vmatprep.subr.mxu0 %v962
    %1176 = vmatpush1.msra.mxu0 %v961
    %1177 = vmatprep.subr.mxu0 %v968
    %1178 = vmatpush1.msra.mxu0 %v967
    %1179 = vmatprep.subr.mxu0 %v974
    %1180 = vmatpush1.msra.mxu0 %v973
    %1181 = vmatprep.subr.mxu0 0.0
    %1182 = vmatpush1.msra.mxu0 0.0
    %1183 = vmatprep.subr.mxu0 0.0
    %1184 = vmatpush1.msra.mxu0 0.0
    %1185 = vmatprep.subr.mxu0 0.0
    %1186 = vmatpush1.msra.mxu0 0.0
    %1187 = vmatprep.subr.mxu0 0.0
    %1188 = vmatpush1.msra.mxu0 0.0
    %1189 = vmatprep.subr.mxu0 0.0
    %1190 = vmatpush1.msra.mxu0 0.0
    %1191 = vmatprep.subr.mxu0 0.0
    %1192 = vmatpush1.msra.mxu0 0.0
    %1193 = vmatprep.subr.mxu0 0.0
    %1194 = vmatpush1.msra.mxu0 0.0
    %1195 = vmatprep.subr.mxu0 0.0
    %1196 = vmatpush1.msra.mxu0 0.0
    %1197 = vmatprep.subr.mxu0 0.0
    %1198 = vmatpush1.msra.mxu0 0.0
    %1199 = vmatprep.subr.mxu0 0.0
    %1200 = vmatpush1.msra.mxu0 0.0
    %1201 = vmatprep.subr.mxu0 0.0
    %1202 = vmatpush1.msra.mxu0 0.0
    %1203 = vmatprep.subr.mxu0 0.0
    %1204 = vmatpush1.msra.mxu0 0.0
    %1205 = vmatprep.subr.mxu0 0.0
    %1206 = vmatpush1.msra.mxu0 0.0
    %1207 = vmatprep.subr.mxu0 0.0
    %1208 = vmatpush1.msra.mxu0 0.0
    %1209 = vmatprep.subr.mxu0 0.0
    %1210 = vmatpush1.msra.mxu0 0.0
    %1211 = vmatprep.subr.mxu0 0.0
    %1212 = vmatpush1.msra.mxu0 0.0
    %1213 = vmatprep.mubr.f32.mxu0 0.0
    %1214 = vmatmul.mubr.f32.gmra.mrb[0].mxu0 %v878
    %v1215 = vpop.f32.mrb[0].mxu0
    %v1216 = vadd.f32 %v996, %v1215
    %v1217 = vpop.f32.mrb[0].mxu0
    %v1218 = vadd.f32 %v1000, %v1217
    %1219 = vdwg.mxu0
    %v1226 = vcombine.low %v1074, %v1076
    %v1227 = vcombine.low %v1145, %v1147
    %v1229 = vunpack.c.l.s4 1983009808
    %v1230 = vunpack.c.0.s8 %v1229
    %v1231 = vlaneseq
    %v1232 = vshrl.u32 %v1231, 7
    %v1233 = vsub.s32 %v1230, %v1232
    %v1234 = vrot.slane %v1226, %v1233
    %v1236 = vunpack.c.l.s4 1983009808
    %v1237 = vunpack.c.0.s8 %v1236
    %v1238 = vlaneseq
    %v1239 = vshrl.u32 %v1238, 7
    %v1240 = vsub.s32 %v1237, %v1239
    %v1241 = vrot.slane %v1227, %v1240
    %v1242 = vcombine.low %v1234, %v1241
    %v1243 = vcombine.low %v1216, %v1218
    %v1245 = vunpack.c.l.s4 1983009808
    %v1246 = vunpack.c.0.s8 %v1245
    %v1247 = vlaneseq
    %v1248 = vshrl.u32 %v1247, 7
    %v1249 = vsub.s32 %v1246, %v1248
    %v1250 = vrot.slane %v1243, %v1249
    %1253 = vst [vmem:[#allocation14] sm:$0xff] %v1242
    %1254 = vst [vmem:[#allocation14 + $0x8] sm:$0xf] %v1250
    %v1255 = vsub.f32 %v1074, %v259
    %v1256 = vsub.f32 %v1076, %v267
    %v1257 = vsub.f32 %v1145, %v266
    %v1258 = vsub.f32 %v1147, %v268
    %v1259 = vsub.f32 %v1216, %v275
    %v1260 = vsub.f32 %v1218, %v276
    %v1261 = vmul.f32 %v1255, %v1255
    %v1262 = vmul.f32 %v1256, %v1256
    %v1263 = vmul.f32 %v1257, %v1257
    %v1264 = vmul.f32 %v1258, %v1258
    %v1265 = vmul.f32 %v1259, %v1259
    %v1266 = vmul.f32 %v1260, %v1260
    %vm1267 = vcmask 1041408
    %v1268 = vsel %vm1267, %v1261, 0.0
    %v1269 = vsel %vm1267, %v1262, 0.0
    %v1270 = vadd.f32 %v1268, %v1269
    %v1271 = vsel %vm1267, %v1263, 0.0
    %v1272 = vadd.f32 %v1270, %v1271
    %v1273 = vsel %vm1267, %v1264, 0.0
    %v1274 = vadd.f32 %v1272, %v1273
    %v1275 = vsel %vm1267, %v1265, 0.0
    %v1276 = vadd.f32 %v1274, %v1275
    %v1277 = vsel %vm1267, %v1266, 0.0
    %v1278 = vadd.f32 %v1276, %v1277
    %1279 = vadd.xlane.f32.xlu0 %v1278
    %v1280 = vpop.xlane.xlu0 %1279
    %v1281 = vrot.slane %v1280, 4
    %v1282 = vadd.f32 %v1280, %v1281
    %v1283 = vrot.slane %v1282, 2
    %v1284 = vadd.f32 %v1282, %v1283
    %v1285 = vrot.slane %v1284, 1
    %v1286 = vadd.f32 %v1284, %v1285
    %s1287 = vtos %v1286
    %v1288 = vmul.f32 %v770, 1.442695
    %v1289 = vpow.pop %v1288
    %v1290 = vsub.f32 %v1289, 1.0
    %v1291 = vmul.f32 %v677, %v677
    %v1292 = vadd.f32 %v1290, %v1291
    %v1293 = vsub.f32 %v1292, %v770
    %v1294 = vsel %vm1267, %v1293, 0.0
    %1295 = vadd.xlane.f32.xlu0 %v1294
    %v1296 = vpop.xlane.xlu0 %1295
    %v1297 = vrot.slane %v1296, 4
    %v1298 = vadd.f32 %v1296, %v1297
    %v1299 = vrot.slane %v1298, 2
    %v1300 = vadd.f32 %v1298, %v1299
    %v1301 = vrot.slane %v1300, 1
    %v1302 = vadd.f32 %v1300, %v1301
    %s1303 = vtos %v1302
    %s1304 = smul.f32 %s1303, 0.5
    %v1305 = vstv %s1287
    %1306 = vst [vmem:[#allocation15] sm:$0x1] %v1305
    %v1307 = vstv %s1304
    %1308 = vst [vmem:[#allocation17] sm:$0x1] %v1307
    // Predicated region
    $region86: #{tpu_custom_call.1} parent=1 // pred_check
      _
    $region87: #{tpu_custom_call.1} parent=1 // pred_check_branch
      %1310 = sbr.rel (0) target = $region89
    $region88: #{tpu_custom_call.1} parent=1 // pred_region
      %s1312 = ssub.s32 192, 192
      %1313 = vsyncadd [#allocation4], %s1312
      %s1315 = sshll.u32 [#allocation14], 4
      %s1316 = int_to_ptr.vmem [resolvable:$true] %s1315
      %1318 = dma.vmem_to_hbm [thread:$0]  %s1316, 192, %s14, [#allocation4]
    $region89: #{tpu_custom_call.1} parent=1 // pred_fallthru
      _
    // Predicated region
    $region90: #{tpu_custom_call.1} parent=1 // pred_check
      _
    $region91: #{tpu_custom_call.1} parent=1 // pred_check_branch
      %1320 = sbr.rel (0) target = $region93
    $region92: #{tpu_custom_call.1} parent=1 // pred_region
      %s1322 = ssub.s32 16, 16
      %1323 = vsyncadd [#allocation16], %s1322
      %s1325 = sshll.u32 [#allocation15], 4
      %s1326 = int_to_ptr.vmem [resolvable:$true] %s1325
      %1328 = dma.vmem_to_hbm [thread:$0]  %s1326, 16, %s15, [#allocation16]
    $region93: #{tpu_custom_call.1} parent=1 // pred_fallthru
      _
    // Predicated region
    $region94: #{tpu_custom_call.1} parent=1 // pred_check
      _
    $region95: #{tpu_custom_call.1} parent=1 // pred_check_branch
      %1330 = sbr.rel (0) target = $region97
    $region96: #{tpu_custom_call.1} parent=1 // pred_region
      %s1332 = ssub.s32 16, 16
      %1333 = vsyncadd [#allocation16], %s1332
      %s1335 = sshll.u32 [#allocation17], 4
      %s1336 = int_to_ptr.vmem [resolvable:$true] %s1335
      %1338 = dma.vmem_to_hbm [thread:$0]  %s1336, 16, %s16, [#allocation16]
    $region97: #{tpu_custom_call.1} parent=1 // pred_fallthru
      _
    // Predicated region
    $region98: #{tpu_custom_call.1} parent=1 // pred_check
      _
    $region99: #{tpu_custom_call.1} parent=1 // pred_check_branch
      %1340 = sbr.rel (0) target = $region101
    $region100: #{tpu_custom_call.1} parent=1 // pred_region
      %1341 = dma.done [#allocation4], 192
    $region101: #{tpu_custom_call.1} parent=1 // pred_fallthru
      _
    // Predicated region
    $region102: #{tpu_custom_call.1} parent=1 // pred_check
      _
    $region103: #{tpu_custom_call.1} parent=1 // pred_check_branch
      %1343 = sbr.rel (0) target = $region105
    $region104: #{tpu_custom_call.1} parent=1 // pred_region
      %1344 = dma.done [#allocation16], 16
    $region105: #{tpu_custom_call.1} parent=1 // pred_fallthru
      _
    // Predicated region
    $region106: #{tpu_custom_call.1} parent=1 // pred_check
      _
    $region107: #{tpu_custom_call.1} parent=1 // pred_check_branch
      %1346 = sbr.rel (0) target = $region109
    $region108: #{tpu_custom_call.1} parent=1 // pred_region
      %1347 = dma.done [#allocation16], 16
    $region109: #{tpu_custom_call.1} parent=1 // pred_fallthru
      _
    %1348 = vsyncpa [#allocation3], 1
    %1349 = vsyncpa [#allocation6], 1
    %1350 = vsyncpa [#allocation9], 1
    %1351 = vsyncpa [#allocation12], 1
    %1352 = vsyncpa [#allocation4], 1
    %1353 = vsyncpa [#allocation16], 1

</llo_original>
